<compile_context>
chip_gen: v7x
topology: tpu7x:2x2x1
jax: 0.10.0
libtpu: 0.0.40
codegen_flags: <defaults>
</compile_context>

<pallas_src>
import math
import functools

import jax
import jax.numpy as jnp
from jax import lax
from jax.experimental import pallas as pl
from jax.experimental.pallas import tpu as pltpu

F32 = jnp.float32
BF16 = jnp.bfloat16


# ----------------------------- kernels --------------------------------------

def _layer_norm(x, w, b, eps=1e-5):
    mu = jnp.mean(x, axis=-1, keepdims=True)
    var = jnp.mean((x - mu) ** 2, axis=-1, keepdims=True)
    return (x - mu) * lax.rsqrt(var + eps) * w + b


def layer_kernel(x_ref, wqkv_ref, bqkv_ref, wo_ref, bo_ref, ln1w_ref, ln1b_ref,
                 w1_ref, b1_ref, w2_ref, b2_ref, ln2w_ref, ln2b_ref, o_ref,
                 *, n_heads, scale):
    """Fused post-LN transformer layer for one batch element (grid step)."""
    x = x_ref[0].astype(F32)                                   # (N, D) f32
    n, d = x.shape
    dh = d // n_heads

    # --- QKV projection: one K=128 MXU GEMM, f32 accumulation ----------------
    qkv = jnp.dot(x.astype(BF16), wqkv_ref[...],
                  preferred_element_type=F32) + bqkv_ref[...]   # (N, 3D) f32

    # --- causal MHSA; head split via static slices of the VMEM-resident tile -
    row = lax.broadcasted_iota(jnp.int32, (n, n), 0)
    col = lax.broadcasted_iota(jnp.int32, (n, n), 1)
    heads = []
    for h in range(n_heads):                                    # static unroll
        q = (qkv[:, h * dh:(h + 1) * dh] * scale).astype(BF16)  # pre-scaled q
        k = qkv[:, d + h * dh:d + (h + 1) * dh].astype(BF16)
        v = qkv[:, 2 * d + h * dh:2 * d + (h + 1) * dh].astype(BF16)
        s = lax.dot_general(q, k, (((1,), (1,)), ((), ())),      # q @ k.T
                            preferred_element_type=F32)          # (N, N) f32
        s = jnp.where(col > row, -1e30, s)                       # finite mask
        m = jnp.max(s, axis=-1, keepdims=True)
        p = jnp.exp(s - m)
        p = p * pl.reciprocal(jnp.sum(p, axis=-1, keepdims=True), approx=True)
        heads.append(jnp.dot(p.astype(BF16), v, preferred_element_type=F32))
    y = jnp.concatenate(heads, axis=-1)                          # (N, D) f32

    # --- out-proj (K=128) + residual + LN1 -----------------------------------
    attn = jnp.dot(y.astype(BF16), wo_ref[...],
                   preferred_element_type=F32) + bo_ref[...]
    h1 = _layer_norm(x + attn, ln1w_ref[...], ln1b_ref[...])

    # --- FFN + residual + LN2 -------------------------------------------------
    f1 = jnp.dot(h1.astype(BF16), w1_ref[...],
                 preferred_element_type=F32) + b1_ref[...]
    f1 = jnp.maximum(f1, 0.0)
    f2 = jnp.dot(f1.astype(BF16), w2_ref[...],
                 preferred_element_type=F32) + b2_ref[...]
    o_ref[0] = _layer_norm(h1 + f2, ln2w_ref[...],
                           ln2b_ref[...]).astype(o_ref.dtype)


def head_kernel(x_ref, w_ref, b_ref, o_ref):
    """LM head logits tile: (TM, D) @ (D, TN) + (1, TN), lane-dense f32 out."""
    o_ref[...] = (jnp.dot(x_ref[...], w_ref[...],
                          preferred_element_type=F32) + b_ref[...])


# ----------------------------- wrappers -------------------------------------

def _const_spec(a):
    """Whole-array block with a constant index map (fetched once, VMEM-resident)."""
    nd = a.ndim
    return pl.BlockSpec(a.shape, lambda i, _nd=nd: (0,) * _nd)


def run_layer(x, lp, n_heads):
    b, n, d = x.shape
    scale = 1.0 / math.sqrt(d // n_heads)
    weights = [lp['wqkv'], lp['bqkv'], lp['wo'], lp['bo'],
               lp['ln1w'], lp['ln1b'], lp['w1'], lp['b1'],
               lp['w2'], lp['b2'], lp['ln2w'], lp['ln2b']]
    return pl.pallas_call(
        functools.partial(layer_kernel, n_heads=n_heads, scale=scale),
        out_shape=jax.ShapeDtypeStruct((b, n, d), BF16),
        grid=(b,),
        in_specs=[pl.BlockSpec((1, n, d), lambda i: (i, 0, 0))]
                 + [_const_spec(w) for w in weights],
        out_specs=pl.BlockSpec((1, n, d), lambda i: (i, 0, 0)),
        compiler_params=pltpu.CompilerParams(
            dimension_semantics=("parallel",)),
    )(x, *weights)


def run_head(x2, w, b, tm=256, tn=512):
    m, d = x2.shape
    nv = w.shape[1]
    tm = min(m, tm)
    tn = min(nv, tn)
    assert m % tm == 0 and nv % tn == 0
    return pl.pallas_call(
        head_kernel,
        out_shape=jax.ShapeDtypeStruct((m, nv), F32),
        grid=(m // tm, nv // tn),      # vocab inner -> activation tile resident
        in_specs=[pl.BlockSpec((tm, d), lambda i, j: (i, 0)),
                  pl.BlockSpec((d, tn), lambda i, j: (0, j)),
                  pl.BlockSpec((1, tn), lambda i, j: (0, j))],
        out_specs=pl.BlockSpec((tm, tn), lambda i, j: (i, j)),
        compiler_params=pltpu.CompilerParams(
            dimension_semantics=("parallel", "parallel")),
    )(x2, w, b)


# --------------------------- parameter setup --------------------------------

def positional_encoding(max_len, d_model):
    assert d_model % 2 == 0
    pos = jnp.arange(max_len, dtype=F32)
    i = jnp.arange(d_model // 2, dtype=F32)
    den = 10000.0 ** (2.0 * i / d_model)
    p_i = pos[:, None] / den[None, :]
    enc = jnp.zeros((max_len, d_model), dtype=F32)
    enc = enc.at[:, 0::2].set(jnp.sin(p_i))
    enc = enc.at[:, 1::2].set(jnp.cos(p_i))
    return enc


def _xavier(key, shape, dtype=BF16):
    limit = math.sqrt(6.0 / (shape[0] + shape[1]))
    return jax.random.uniform(key, shape, F32, -limit, limit).astype(dtype)


def init_params(key, n_vocab, d_model, n_layers, d_ff):
    keys = iter(jax.random.split(key, 4 + 4 * n_layers))
    params = {
        'embedding': jax.random.normal(next(keys), (n_vocab, d_model), F32),
        'head_w': _xavier(next(keys), (d_model, n_vocab)),        # bf16 in HBM
        'head_b': jnp.zeros((1, n_vocab), F32),
        'layers': [],
    }
    for _ in range(n_layers):
        lp = {
            'wqkv': _xavier(next(keys), (d_model, 3 * d_model)),   # bf16
            'bqkv': jnp.zeros((1, 3 * d_model), F32),
            'wo':   _xavier(next(keys), (d_model, d_model)),       # bf16
            'bo':   jnp.zeros((1, d_model), F32),
            'ln1w': jnp.ones((1, d_model), F32),
            'ln1b': jnp.zeros((1, d_model), F32),
            'w1':   _xavier(next(keys), (d_model, d_ff)),          # bf16
            'b1':   jnp.zeros((1, d_ff), F32),
            'w2':   _xavier(next(keys), (d_ff, d_model)),          # bf16
            'b2':   jnp.zeros((1, d_model), F32),
            'ln2w': jnp.ones((1, d_model), F32),
            'ln2b': jnp.zeros((1, d_model), F32),
        }
        params['layers'].append(lp)
    return params


# ------------------------------ forward -------------------------------------

def generative_text_transformer_forward(tokens, params, pos_enc, n_heads):
    """tokens: int32 [B, N].  Returns logits float32 [B, N, n_vocab]."""
    batch, seq = tokens.shape
    d_model = params['embedding'].shape[1]
    # Embedding gather + scale + positional encoding: plain-JAX glue
    # (data-dependent gather; no benefit from a Pallas kernel at this size).
    x = jnp.take(params['embedding'], tokens, axis=0) * math.sqrt(d_model)
    x = (x + pos_enc[:seq][None, :, :]).astype(BF16)             # (B, N, D) bf16
    # pad_index=None -> only the causal mask applies (built inside the kernel).
    for lp in params['layers']:
        x = run_layer(x, lp, n_heads)                             # (B, N, D) bf16
    x2 = x.reshape(batch * seq, d_model)
    logits = run_head(x2, params['head_w'], params['head_b'])     # (M, V) f32
    return logits.reshape(batch, seq, -1)


# ------------------------------- main ---------------------------------------

if __name__ == "__main__":
    # Module defaults: d_model=128, d_ff=256, n_layers=2, n_heads=2 -> every
    # kernel output's last dim is a multiple of 128 (lane-dense stores).
    n_vocab, max_len, d_model = 128, 128, 128
    n_layers, n_heads, d_ff = 2, 2, 256
    batch, seq = 2, 8

    key = jax.random.PRNGKey(0)
    k_params, k_tokens = jax.random.split(key)

    params = init_params(k_params, n_vocab, d_model, n_layers, d_ff)
    pos_enc = positional_encoding(max_len, d_model)
    tokens = jax.random.randint(k_tokens, (batch, seq), 0, n_vocab, dtype=jnp.int32)

    logits = generative_text_transformer_forward(tokens, params, pos_enc, n_heads)
    logits = jax.block_until_ready(logits)
    assert logits.shape == (batch, seq, n_vocab)
    assert bool(jnp.all(jnp.isfinite(logits)))
    print("KERNEL_OK")
</pallas_src>

<mosaic_0001>
module attributes {stable_mosaic.version = 11 : i64} {
  func.func @layer_kernel(%arg0: i32, %arg1: memref<1x8x128xbf16, #tpu.memory_space<vmem>>, %arg2: memref<128x384xbf16, #tpu.memory_space<vmem>>, %arg3: memref<1x384xf32, #tpu.memory_space<vmem>>, %arg4: memref<128x128xbf16, #tpu.memory_space<vmem>>, %arg5: memref<1x128xf32, #tpu.memory_space<vmem>>, %arg6: memref<1x128xf32, #tpu.memory_space<vmem>>, %arg7: memref<1x128xf32, #tpu.memory_space<vmem>>, %arg8: memref<128x256xbf16, #tpu.memory_space<vmem>>, %arg9: memref<1x256xf32, #tpu.memory_space<vmem>>, %arg10: memref<256x128xbf16, #tpu.memory_space<vmem>>, %arg11: memref<1x128xf32, #tpu.memory_space<vmem>>, %arg12: memref<1x128xf32, #tpu.memory_space<vmem>>, %arg13: memref<1x128xf32, #tpu.memory_space<vmem>>, %arg14: memref<1x8x128xbf16, #tpu.memory_space<vmem>>) attributes {dimension_semantics = [#tpu.dimension_semantics<parallel>], iteration_bounds = array<i64: 2>, scalar_prefetch = 0 : i64, scratch_operands = 0 : i64, tpu.core_type = #tpu.core_type<tc>, window_params = [{transform_indices = @transform_0, window_bounds = array<i64: 1, 8, 128>}, {pipeline_mode = #tpu.pipeline_mode<synchronous>, transform_indices = @transform_1, window_bounds = array<i64: 128, 384>}, {pipeline_mode = #tpu.pipeline_mode<synchronous>, transform_indices = @transform_2, window_bounds = array<i64: 1, 384>}, {pipeline_mode = #tpu.pipeline_mode<synchronous>, transform_indices = @transform_3, window_bounds = array<i64: 128, 128>}, {pipeline_mode = #tpu.pipeline_mode<synchronous>, transform_indices = @transform_4, window_bounds = array<i64: 1, 128>}, {pipeline_mode = #tpu.pipeline_mode<synchronous>, transform_indices = @transform_5, window_bounds = array<i64: 1, 128>}, {pipeline_mode = #tpu.pipeline_mode<synchronous>, transform_indices = @transform_6, window_bounds = array<i64: 1, 128>}, {pipeline_mode = #tpu.pipeline_mode<synchronous>, transform_indices = @transform_7, window_bounds = array<i64: 128, 256>}, {pipeline_mode = #tpu.pipeline_mode<synchronous>, transform_indices = @transform_8, window_bounds = array<i64: 1, 256>}, {pipeline_mode = #tpu.pipeline_mode<synchronous>, transform_indices = @transform_9, window_bounds = array<i64: 256, 128>}, {pipeline_mode = #tpu.pipeline_mode<synchronous>, transform_indices = @transform_10, window_bounds = array<i64: 1, 128>}, {pipeline_mode = #tpu.pipeline_mode<synchronous>, transform_indices = @transform_11, window_bounds = array<i64: 1, 128>}, {pipeline_mode = #tpu.pipeline_mode<synchronous>, transform_indices = @transform_12, window_bounds = array<i64: 1, 128>}, {transform_indices = @transform_13, window_bounds = array<i64: 1, 8, 128>}]} {
    %c0 = arith.constant 0 : index
    %c0_0 = arith.constant 0 : index
    %c0_1 = arith.constant 0 : index
    %0 = vector.load %arg1[%c0, %c0_0, %c0_1] : memref<1x8x128xbf16, #tpu.memory_space<vmem>>, vector<1x8x128xbf16>
    %1 = vector.shape_cast %0 : vector<1x8x128xbf16> to vector<8x128xbf16>
    %2 = arith.extf %1 : vector<8x128xbf16> to vector<8x128xf32>
    %3 = arith.truncf %2 : vector<8x128xf32> to vector<8x128xbf16>
    %c0_2 = arith.constant 0 : index
    %c0_3 = arith.constant 0 : index
    %4 = vector.load %arg2[%c0_2, %c0_3] : memref<128x384xbf16, #tpu.memory_space<vmem>>, vector<128x384xbf16>
    %cst = arith.constant dense<0.000000e+00> : vector<8x384xf32>
    %5 = tpu.matmul %3, %4, %cst {dimension_numbers = #tpu.dot_dimension_numbers<[1], [0], [0], [1], [0, 0, 1, 1], [], []>} : vector<8x128xbf16>, vector<128x384xbf16>, vector<8x384xf32> -> vector<8x384xf32>
    %c0_4 = arith.constant 0 : index
    %c0_5 = arith.constant 0 : index
    %6 = vector.load %arg3[%c0_4, %c0_5] : memref<1x384xf32, #tpu.memory_space<vmem>>, vector<1x384xf32>
    %7 = vector.broadcast %6 : vector<1x384xf32> to vector<8x384xf32>
    %8 = arith.addf %5, %7 : vector<8x384xf32>
    %9 = tpu.iota {dimensions = array<i32: 0>} : vector<8x8xi32>
    %10 = tpu.iota {dimensions = array<i32: 1>} : vector<8x8xi32>
    %11 = vector.extract_strided_slice %8 {offsets = [0, 0], sizes = [8, 64], strides = [1, 1]} : vector<8x384xf32> to vector<8x64xf32>
    %cst_6 = arith.constant 1.250000e-01 : f32
    %12 = vector.broadcast %cst_6 : f32 to vector<8x64xf32>
    %13 = arith.mulf %11, %12 : vector<8x64xf32>
    %14 = arith.truncf %13 : vector<8x64xf32> to vector<8x64xbf16>
    %15 = vector.extract_strided_slice %8 {offsets = [0, 128], sizes = [8, 64], strides = [1, 1]} : vector<8x384xf32> to vector<8x64xf32>
    %16 = arith.truncf %15 : vector<8x64xf32> to vector<8x64xbf16>
    %17 = vector.extract_strided_slice %8 {offsets = [0, 256], sizes = [8, 64], strides = [1, 1]} : vector<8x384xf32> to vector<8x64xf32>
    %18 = arith.truncf %17 : vector<8x64xf32> to vector<8x64xbf16>
    %cst_7 = arith.constant dense<0.000000e+00> : vector<8x8xf32>
    %19 = tpu.matmul %14, %16, %cst_7 {dimension_numbers = #tpu.dot_dimension_numbers<[1], [1], [0], [0], [0, 0, 1, 0], [], []>} : vector<8x64xbf16>, vector<8x64xbf16>, vector<8x8xf32> -> vector<8x8xf32>
    %20 = arith.cmpi sgt, %10, %9 : vector<8x8xi32>
    %cst_8 = arith.constant -1.000000e+30 : f32
    %21 = vector.broadcast %cst_8 : f32 to vector<8x8xf32>
    %22 = arith.select %20, %21, %19 : vector<8x8xi1>, vector<8x8xf32>
    %cst_9 = arith.constant dense<0xFF800000> : vector<8xf32>
    %23 = vector.multi_reduction <maximumf>, %22, %cst_9 [1] : vector<8x8xf32> to vector<8xf32>
    %24 = vector.shape_cast %23 : vector<8xf32> to vector<8x1xf32>
    %25 = vector.broadcast %24 : vector<8x1xf32> to vector<8x8xf32>
    %26 = arith.subf %22, %25 : vector<8x8xf32>
    %27 = math.exp %26 : vector<8x8xf32>
    %cst_10 = arith.constant dense<0.000000e+00> : vector<8xf32>
    %28 = vector.multi_reduction <add>, %27, %cst_10 [1] : vector<8x8xf32> to vector<8xf32>
    %29 = vector.shape_cast %28 : vector<8xf32> to vector<8x1xf32>
    %30 = tpu.reciprocal %29 {approx = true} : vector<8x1xf32> -> vector<8x1xf32>
    %31 = vector.broadcast %30 : vector<8x1xf32> to vector<8x8xf32>
    %32 = arith.mulf %27, %31 : vector<8x8xf32>
    %33 = arith.truncf %32 : vector<8x8xf32> to vector<8x8xbf16>
    %cst_11 = arith.constant dense<0.000000e+00> : vector<8x64xf32>
    %34 = tpu.matmul %33, %18, %cst_11 {dimension_numbers = #tpu.dot_dimension_numbers<[1], [0], [0], [1], [0, 0, 1, 1], [], []>} : vector<8x8xbf16>, vector<8x64xbf16>, vector<8x64xf32> -> vector<8x64xf32>
    %35 = vector.extract_strided_slice %8 {offsets = [0, 64], sizes = [8, 64], strides = [1, 1]} : vector<8x384xf32> to vector<8x64xf32>
    %cst_12 = arith.constant 1.250000e-01 : f32
    %36 = vector.broadcast %cst_12 : f32 to vector<8x64xf32>
    %37 = arith.mulf %35, %36 : vector<8x64xf32>
    %38 = arith.truncf %37 : vector<8x64xf32> to vector<8x64xbf16>
    %39 = vector.extract_strided_slice %8 {offsets = [0, 192], sizes = [8, 64], strides = [1, 1]} : vector<8x384xf32> to vector<8x64xf32>
    %40 = arith.truncf %39 : vector<8x64xf32> to vector<8x64xbf16>
    %41 = vector.extract_strided_slice %8 {offsets = [0, 320], sizes = [8, 64], strides = [1, 1]} : vector<8x384xf32> to vector<8x64xf32>
    %42 = arith.truncf %41 : vector<8x64xf32> to vector<8x64xbf16>
    %cst_13 = arith.constant dense<0.000000e+00> : vector<8x8xf32>
    %43 = tpu.matmul %38, %40, %cst_13 {dimension_numbers = #tpu.dot_dimension_numbers<[1], [1], [0], [0], [0, 0, 1, 0], [], []>} : vector<8x64xbf16>, vector<8x64xbf16>, vector<8x8xf32> -> vector<8x8xf32>
    %44 = arith.cmpi sgt, %10, %9 : vector<8x8xi32>
    %cst_14 = arith.constant -1.000000e+30 : f32
    %45 = vector.broadcast %cst_14 : f32 to vector<8x8xf32>
    %46 = arith.select %44, %45, %43 : vector<8x8xi1>, vector<8x8xf32>
    %cst_15 = arith.constant dense<0xFF800000> : vector<8xf32>
    %47 = vector.multi_reduction <maximumf>, %46, %cst_15 [1] : vector<8x8xf32> to vector<8xf32>
    %48 = vector.shape_cast %47 : vector<8xf32> to vector<8x1xf32>
    %49 = vector.broadcast %48 : vector<8x1xf32> to vector<8x8xf32>
    %50 = arith.subf %46, %49 : vector<8x8xf32>
    %51 = math.exp %50 : vector<8x8xf32>
    %cst_16 = arith.constant dense<0.000000e+00> : vector<8xf32>
    %52 = vector.multi_reduction <add>, %51, %cst_16 [1] : vector<8x8xf32> to vector<8xf32>
    %53 = vector.shape_cast %52 : vector<8xf32> to vector<8x1xf32>
    %54 = tpu.reciprocal %53 {approx = true} : vector<8x1xf32> -> vector<8x1xf32>
    %55 = vector.broadcast %54 : vector<8x1xf32> to vector<8x8xf32>
    %56 = arith.mulf %51, %55 : vector<8x8xf32>
    %57 = arith.truncf %56 : vector<8x8xf32> to vector<8x8xbf16>
    %cst_17 = arith.constant dense<0.000000e+00> : vector<8x64xf32>
    %58 = tpu.matmul %57, %42, %cst_17 {dimension_numbers = #tpu.dot_dimension_numbers<[1], [0], [0], [1], [0, 0, 1, 1], [], []>} : vector<8x8xbf16>, vector<8x64xbf16>, vector<8x64xf32> -> vector<8x64xf32>
    %59 = tpu.concatenate %34, %58 in 1 : vector<8x64xf32>, vector<8x64xf32> -> vector<8x128xf32>
    %60 = arith.truncf %59 : vector<8x128xf32> to vector<8x128xbf16>
    %c0_18 = arith.constant 0 : index
    %c0_19 = arith.constant 0 : index
    %61 = vector.load %arg4[%c0_18, %c0_19] : memref<128x128xbf16, #tpu.memory_space<vmem>>, vector<128x128xbf16>
    %cst_20 = arith.constant dense<0.000000e+00> : vector<8x128xf32>
    %62 = tpu.matmul %60, %61, %cst_20 {dimension_numbers = #tpu.dot_dimension_numbers<[1], [0], [0], [1], [0, 0, 1, 1], [], []>} : vector<8x128xbf16>, vector<128x128xbf16>, vector<8x128xf32> -> vector<8x128xf32>
    %c0_21 = arith.constant 0 : index
    %c0_22 = arith.constant 0 : index
    %63 = vector.load %arg5[%c0_21, %c0_22] : memref<1x128xf32, #tpu.memory_space<vmem>>, vector<1x128xf32>
    %64 = vector.broadcast %63 : vector<1x128xf32> to vector<8x128xf32>
    %65 = arith.addf %62, %64 : vector<8x128xf32>
    %66 = arith.addf %2, %65 : vector<8x128xf32>
    %c0_23 = arith.constant 0 : index
    %c0_24 = arith.constant 0 : index
    %67 = vector.load %arg6[%c0_23, %c0_24] : memref<1x128xf32, #tpu.memory_space<vmem>>, vector<1x128xf32>
    %c0_25 = arith.constant 0 : index
    %c0_26 = arith.constant 0 : index
    %68 = vector.load %arg7[%c0_25, %c0_26] : memref<1x128xf32, #tpu.memory_space<vmem>>, vector<1x128xf32>
    %cst_27 = arith.constant dense<0.000000e+00> : vector<8xf32>
    %69 = vector.multi_reduction <add>, %66, %cst_27 [1] : vector<8x128xf32> to vector<8xf32>
    %70 = vector.shape_cast %69 : vector<8xf32> to vector<8x1xf32>
    %cst_28 = arith.constant 1.280000e+02 : f32
    %71 = vector.broadcast %cst_28 : f32 to vector<8x1xf32>
    %72 = arith.divf %70, %71 : vector<8x1xf32>
    %73 = vector.broadcast %72 : vector<8x1xf32> to vector<8x128xf32>
    %74 = arith.subf %66, %73 : vector<8x128xf32>
    %75 = arith.mulf %74, %74 : vector<8x128xf32>
    %cst_29 = arith.constant dense<0.000000e+00> : vector<8xf32>
    %76 = vector.multi_reduction <add>, %75, %cst_29 [1] : vector<8x128xf32> to vector<8xf32>
    %77 = vector.shape_cast %76 : vector<8xf32> to vector<8x1xf32>
    %cst_30 = arith.constant 1.280000e+02 : f32
    %78 = vector.broadcast %cst_30 : f32 to vector<8x1xf32>
    %79 = arith.divf %77, %78 : vector<8x1xf32>
    %80 = vector.broadcast %72 : vector<8x1xf32> to vector<8x128xf32>
    %81 = arith.subf %66, %80 : vector<8x128xf32>
    %cst_31 = arith.constant 9.99999974E-6 : f32
    %82 = vector.broadcast %cst_31 : f32 to vector<8x1xf32>
    %83 = arith.addf %79, %82 : vector<8x1xf32>
    %84 = math.rsqrt %83 : vector<8x1xf32>
    %85 = vector.broadcast %84 : vector<8x1xf32> to vector<8x128xf32>
    %86 = arith.mulf %81, %85 : vector<8x128xf32>
    %87 = vector.broadcast %67 : vector<1x128xf32> to vector<8x128xf32>
    %88 = arith.mulf %86, %87 : vector<8x128xf32>
    %89 = vector.broadcast %68 : vector<1x128xf32> to vector<8x128xf32>
    %90 = arith.addf %88, %89 : vector<8x128xf32>
    %91 = arith.truncf %90 : vector<8x128xf32> to vector<8x128xbf16>
    %c0_32 = arith.constant 0 : index
    %c0_33 = arith.constant 0 : index
    %92 = vector.load %arg8[%c0_32, %c0_33] : memref<128x256xbf16, #tpu.memory_space<vmem>>, vector<128x256xbf16>
    %cst_34 = arith.constant dense<0.000000e+00> : vector<8x256xf32>
    %93 = tpu.matmul %91, %92, %cst_34 {dimension_numbers = #tpu.dot_dimension_numbers<[1], [0], [0], [1], [0, 0, 1, 1], [], []>} : vector<8x128xbf16>, vector<128x256xbf16>, vector<8x256xf32> -> vector<8x256xf32>
    %c0_35 = arith.constant 0 : index
    %c0_36 = arith.constant 0 : index
    %94 = vector.load %arg9[%c0_35, %c0_36] : memref<1x256xf32, #tpu.memory_space<vmem>>, vector<1x256xf32>
    %95 = vector.broadcast %94 : vector<1x256xf32> to vector<8x256xf32>
    %96 = arith.addf %93, %95 : vector<8x256xf32>
    %cst_37 = arith.constant 0.000000e+00 : f32
    %97 = vector.broadcast %cst_37 : f32 to vector<8x256xf32>
    %98 = arith.maximumf %96, %97 : vector<8x256xf32>
    %99 = arith.truncf %98 : vector<8x256xf32> to vector<8x256xbf16>
    %c0_38 = arith.constant 0 : index
    %c0_39 = arith.constant 0 : index
    %100 = vector.load %arg10[%c0_38, %c0_39] : memref<256x128xbf16, #tpu.memory_space<vmem>>, vector<256x128xbf16>
    %cst_40 = arith.constant dense<0.000000e+00> : vector<8x128xf32>
    %101 = tpu.matmul %99, %100, %cst_40 {dimension_numbers = #tpu.dot_dimension_numbers<[1], [0], [0], [1], [0, 0, 1, 1], [], []>} : vector<8x256xbf16>, vector<256x128xbf16>, vector<8x128xf32> -> vector<8x128xf32>
    %c0_41 = arith.constant 0 : index
    %c0_42 = arith.constant 0 : index
    %102 = vector.load %arg11[%c0_41, %c0_42] : memref<1x128xf32, #tpu.memory_space<vmem>>, vector<1x128xf32>
    %103 = vector.broadcast %102 : vector<1x128xf32> to vector<8x128xf32>
    %104 = arith.addf %101, %103 : vector<8x128xf32>
    %105 = arith.addf %90, %104 : vector<8x128xf32>
    %c0_43 = arith.constant 0 : index
    %c0_44 = arith.constant 0 : index
    %106 = vector.load %arg12[%c0_43, %c0_44] : memref<1x128xf32, #tpu.memory_space<vmem>>, vector<1x128xf32>
    %c0_45 = arith.constant 0 : index
    %c0_46 = arith.constant 0 : index
    %107 = vector.load %arg13[%c0_45, %c0_46] : memref<1x128xf32, #tpu.memory_space<vmem>>, vector<1x128xf32>
    %cst_47 = arith.constant dense<0.000000e+00> : vector<8xf32>
    %108 = vector.multi_reduction <add>, %105, %cst_47 [1] : vector<8x128xf32> to vector<8xf32>
    %109 = vector.shape_cast %108 : vector<8xf32> to vector<8x1xf32>
    %cst_48 = arith.constant 1.280000e+02 : f32
    %110 = vector.broadcast %cst_48 : f32 to vector<8x1xf32>
    %111 = arith.divf %109, %110 : vector<8x1xf32>
    %112 = vector.broadcast %111 : vector<8x1xf32> to vector<8x128xf32>
    %113 = arith.subf %105, %112 : vector<8x128xf32>
    %114 = arith.mulf %113, %113 : vector<8x128xf32>
    %cst_49 = arith.constant dense<0.000000e+00> : vector<8xf32>
    %115 = vector.multi_reduction <add>, %114, %cst_49 [1] : vector<8x128xf32> to vector<8xf32>
    %116 = vector.shape_cast %115 : vector<8xf32> to vector<8x1xf32>
    %cst_50 = arith.constant 1.280000e+02 : f32
    %117 = vector.broadcast %cst_50 : f32 to vector<8x1xf32>
    %118 = arith.divf %116, %117 : vector<8x1xf32>
    %119 = vector.broadcast %111 : vector<8x1xf32> to vector<8x128xf32>
    %120 = arith.subf %105, %119 : vector<8x128xf32>
    %cst_51 = arith.constant 9.99999974E-6 : f32
    %121 = vector.broadcast %cst_51 : f32 to vector<8x1xf32>
    %122 = arith.addf %118, %121 : vector<8x1xf32>
    %123 = math.rsqrt %122 : vector<8x1xf32>
    %124 = vector.broadcast %123 : vector<8x1xf32> to vector<8x128xf32>
    %125 = arith.mulf %120, %124 : vector<8x128xf32>
    %126 = vector.broadcast %106 : vector<1x128xf32> to vector<8x128xf32>
    %127 = arith.mulf %125, %126 : vector<8x128xf32>
    %128 = vector.broadcast %107 : vector<1x128xf32> to vector<8x128xf32>
    %129 = arith.addf %127, %128 : vector<8x128xf32>
    %130 = arith.truncf %129 : vector<8x128xf32> to vector<8x128xbf16>
    %c0_52 = arith.constant 0 : index
    %c0_53 = arith.constant 0 : index
    %c0_54 = arith.constant 0 : index
    %131 = vector.load %arg14[%c0_52, %c0_53, %c0_54] : memref<1x8x128xbf16, #tpu.memory_space<vmem>>, vector<1x8x128xbf16>
    %132 = vector.shape_cast %131 : vector<1x8x128xbf16> to vector<8x128xbf16>
    %133 = vector.shape_cast %130 : vector<8x128xbf16> to vector<1x8x128xbf16>
    tpu.vector_store %arg14[%c0_52, %c0_53, %c0_54], %133 {strides = array<i32>} : memref<1x8x128xbf16, #tpu.memory_space<vmem>>, vector<1x8x128xbf16>,
    return
  }
  func.func @transform_0(%arg0: i32) -> (i32, i32, i32) {
    %c0_i32 = arith.constant 0 : i32
    %c0_i32_0 = arith.constant 0 : i32
    %c0_i32_1 = arith.constant 0 : i32
    return %arg0, %c0_i32, %c0_i32_0 : i32, i32, i32
  }
  func.func @transform_1(%arg0: i32) -> (i32, i32) {
    %c0_i32 = arith.constant 0 : i32
    %c0_i32_0 = arith.constant 0 : i32
    %c0_i32_1 = arith.constant 0 : i32
    return %c0_i32, %c0_i32_0 : i32, i32
  }
  func.func @transform_2(%arg0: i32) -> (i32, i32) {
    %c0_i32 = arith.constant 0 : i32
    %c0_i32_0 = arith.constant 0 : i32
    %c0_i32_1 = arith.constant 0 : i32
    return %c0_i32, %c0_i32_0 : i32, i32
  }
  func.func @transform_3(%arg0: i32) -> (i32, i32) {
    %c0_i32 = arith.constant 0 : i32
    %c0_i32_0 = arith.constant 0 : i32
    %c0_i32_1 = arith.constant 0 : i32
    return %c0_i32, %c0_i32_0 : i32, i32
  }
  func.func @transform_4(%arg0: i32) -> (i32, i32) {
    %c0_i32 = arith.constant 0 : i32
    %c0_i32_0 = arith.constant 0 : i32
    %c0_i32_1 = arith.constant 0 : i32
    return %c0_i32, %c0_i32_0 : i32, i32
  }
  func.func @transform_5(%arg0: i32) -> (i32, i32) {
    %c0_i32 = arith.constant 0 : i32
    %c0_i32_0 = arith.constant 0 : i32
    %c0_i32_1 = arith.constant 0 : i32
    return %c0_i32, %c0_i32_0 : i32, i32
  }
  func.func @transform_6(%arg0: i32) -> (i32, i32) {
    %c0_i32 = arith.constant 0 : i32
    %c0_i32_0 = arith.constant 0 : i32
    %c0_i32_1 = arith.constant 0 : i32
    return %c0_i32, %c0_i32_0 : i32, i32
  }
  func.func @transform_7(%arg0: i32) -> (i32, i32) {
    %c0_i32 = arith.constant 0 : i32
    %c0_i32_0 = arith.constant 0 : i32
    %c0_i32_1 = arith.constant 0 : i32
    return %c0_i32, %c0_i32_0 : i32, i32
  }
  func.func @transform_8(%arg0: i32) -> (i32, i32) {
    %c0_i32 = arith.constant 0 : i32
    %c0_i32_0 = arith.constant 0 : i32
    %c0_i32_1 = arith.constant 0 : i32
    return %c0_i32, %c0_i32_0 : i32, i32
  }
  func.func @transform_9(%arg0: i32) -> (i32, i32) {
    %c0_i32 = arith.constant 0 : i32
    %c0_i32_0 = arith.constant 0 : i32
    %c0_i32_1 = arith.constant 0 : i32
    return %c0_i32, %c0_i32_0 : i32, i32
  }
  func.func @transform_10(%arg0: i32) -> (i32, i32) {
    %c0_i32 = arith.constant 0 : i32
    %c0_i32_0 = arith.constant 0 : i32
    %c0_i32_1 = arith.constant 0 : i32
    return %c0_i32, %c0_i32_0 : i32, i32
  }
  func.func @transform_11(%arg0: i32) -> (i32, i32) {
    %c0_i32 = arith.constant 0 : i32
    %c0_i32_0 = arith.constant 0 : i32
    %c0_i32_1 = arith.constant 0 : i32
    return %c0_i32, %c0_i32_0 : i32, i32
  }
  func.func @transform_12(%arg0: i32) -> (i32, i32) {
    %c0_i32 = arith.constant 0 : i32
    %c0_i32_0 = arith.constant 0 : i32
    %c0_i32_1 = arith.constant 0 : i32
    return %c0_i32, %c0_i32_0 : i32, i32
  }
  func.func @transform_13(%arg0: i32) -> (i32, i32, i32) {
    %c0_i32 = arith.constant 0 : i32
    %c0_i32_0 = arith.constant 0 : i32
    %c0_i32_1 = arith.constant 0 : i32
    return %arg0, %c0_i32, %c0_i32_0 : i32, i32, i32
  }
}

</mosaic_0001>

<llo_original>
// kernel: tpu_custom_call.1
$region0: #{tpu_custom_call.1}
  #allocation0 [shape = 'u32[]', space=smem, size = 0x4, offset = 0x4, fixed_abs, tag = 'smem constant byte address 0x4 - core index']
  #allocation1 [shape = 'u32[144,128]{1,0:T(1,128)}', space=vmem, size = 0x12000, scoped, tag = 'internal scratch']
  %s0 = inlined_call_operand.hbm [shape: bf16[2,8,128], index: 0, kind: input, shape index: {}]
  %s1 = inlined_call_operand.hbm [shape: bf16[128,384], index: 1, kind: input, shape index: {}]
  %s2 = inlined_call_operand.vmem [shape: f32[1,384], index: 2, kind: input, shape index: {}]
  %s3 = inlined_call_operand.hbm [shape: bf16[128,128], index: 3, kind: input, shape index: {}]
  %s4 = inlined_call_operand.vmem [shape: f32[1,128], index: 4, kind: input, shape index: {}]
  %s5 = inlined_call_operand.vmem [shape: f32[1,128], index: 5, kind: input, shape index: {}]
  %s6 = inlined_call_operand.vmem [shape: f32[1,128], index: 6, kind: input, shape index: {}]
  %s7 = inlined_call_operand.hbm [shape: bf16[128,256], index: 7, kind: input, shape index: {}]
  %s8 = inlined_call_operand.vmem [shape: f32[1,256], index: 8, kind: input, shape index: {}]
  %s9 = inlined_call_operand.hbm [shape: bf16[256,128], index: 9, kind: input, shape index: {}]
  %s10 = inlined_call_operand.vmem [shape: f32[1,128], index: 10, kind: input, shape index: {}]
  %s11 = inlined_call_operand.vmem [shape: f32[1,128], index: 11, kind: input, shape index: {}]
  %s12 = inlined_call_operand.vmem [shape: f32[1,128], index: 12, kind: input, shape index: {}]
  %s13 = inlined_call_operand.hbm [shape: bf16[2,8,128], index: 13, kind: output, shape index: {}]
  %s14 = sld [smem:[#allocation0]]
  $region105: #{tpu_custom_call.1} parent=0
    _
  %s16 = ssub.s32 1, %s14
  %s17 = scalar_select 0, %s16, %s14
  $region1: #{tpu_custom_call.1} parent=0
    #allocation2 [shape = 'u8[4096]{0}', space=vmem, size = 0x1000, scoped, tag = 'input window, operand 0']
    #allocation3 [shape = 's32[2]{0}', space=sflag, size = 0x8, scoped, tag = 'scoped memory for tpu_custom_call.1']
    #allocation4 [shape = 's32[2]{0}', space=sflag, size = 0x8, scoped, tag = 'scoped memory for tpu_custom_call.1']
    #allocation5 [shape = 'u8[98304]{0}', space=vmem, size = 0x18000, scoped, tag = 'input window, operand 1, single buffered']
    #allocation6 [shape = 's32[1]{0}', space=sflag, size = 0x4, scoped, tag = 'scoped memory for tpu_custom_call.1']
    #allocation7 [shape = 'u8[32768]{0}', space=vmem, size = 0x8000, scoped, tag = 'input window, operand 3, single buffered']
    #allocation8 [shape = 'u8[65536]{0}', space=vmem, size = 0x10000, scoped, tag = 'input window, operand 7, single buffered']
    #allocation9 [shape = 's32[1]{0}', space=sflag, size = 0x4, scoped, tag = 'scoped memory for tpu_custom_call.1']
    #allocation10 [shape = 'u8[65536]{0}', space=vmem, size = 0x10000, scoped, tag = 'input window, operand 9, single buffered']
    #allocation11 [shape = 'u8[4096]{0}', space=vmem, size = 0x1000, scoped, tag = 'output window, operand 0']
    %18 = vsyncpa [#allocation3], 0
    %s19 = scalar_lea.sflag [#allocation3], 1
    %20 = vsyncpa %s19, 0
    %21 = vsyncpa [#allocation6], 0
    %22 = vsyncpa [#allocation9], 0
    %23 = vsyncpa [#allocation4], 0
    %s24 = scalar_lea.sflag [#allocation4], 1
    %25 = vsyncpa %s24, 0
    loop: start=0, step=1, limit=4
    $region2: #{tpu_custom_call.1} parent=1 // loop_pre_header
      _
    $region3: #{tpu_custom_call.1} parent=1 // loop_header
      %s27 = sphi 0, %s31
      %p28 = scmp.ge.s32.totalorder %s27, 4
      %s37 = sphi 0, %s39
      %s40 = sphi 0, %s37
      %s41 = sphi 0, %s40
      %s57 = sphi 0, %s41
      %s61 = sphi 0, %s61
      %s63 = sphi 0, %s61
      %s64 = sphi 0, %s63
      %s78 = sphi 0, %s64
      %s82 = sphi 0, %s82
      %s84 = sphi 0, %s82
      %s85 = sphi 0, %s84
      %s99 = sphi 0, %s85
      %s103 = sphi 0, %s103
      %s105 = sphi 0, %s103
      %s106 = sphi 0, %s105
      %s120 = sphi 0, %s106
      %s124 = sphi 0, %s124
      %s126 = sphi 0, %s124
      %s127 = sphi 0, %s126
      %s141 = sphi 0, %s127
      %s145 = sphi 0, %s145
      %s147 = sphi 0, %s145
      %s148 = sphi 0, %s147
      %s162 = sphi 0, %s148
      %s166 = sphi 0, %s166
      %s168 = sphi 0, %s166
      %s169 = sphi 0, %s168
      %s183 = sphi 0, %s169
      %s187 = sphi 0, %s187
      %s189 = sphi 0, %s187
      %s190 = sphi 0, %s189
      %s204 = sphi 0, %s190
      %s208 = sphi 0, %s208
      %s210 = sphi 0, %s208
      %s211 = sphi 0, %s210
      %s225 = sphi 0, %s211
      %s229 = sphi 0, %s229
      %s231 = sphi 0, %s229
      %s232 = sphi 0, %s231
      %s246 = sphi 0, %s232
      %s250 = sphi 0, %s250
      %s252 = sphi 0, %s250
      %s253 = sphi 0, %s252
      %s267 = sphi 0, %s253
      %s271 = sphi 0, %s271
      %s273 = sphi 0, %s271
      %s274 = sphi 0, %s273
      %s288 = sphi 0, %s274
      %s292 = sphi 0, %s292
      %s294 = sphi 0, %s292
      %s295 = sphi 0, %s294
      %s309 = sphi 0, %s295
      %s315 = sphi 0, %s317
      %s318 = sphi 0, %s315
      %s319 = sphi 0, %s318
      %s335 = sphi 0, %s319
    $region4: #{tpu_custom_call.1} parent=1 // loop_header_branch
      %30 = sbr.rel (%p28) target = $region8
    $region5: #{tpu_custom_call.1} parent=1 // loop_body
      %s32 = ssub.s32 %s27, 1
      %s33 = ssub.s32 %s27, 2
      %s34 = sadd.s32 %s27, 1
      %s35 = ssub.s32 %s27, %s34
      %p36 = scmp.eq.s32.totalorder %s35, 0
      %s38 = sadd.s32 %s37, 1
      %s39 = scalar_select %p36, %s37, %s38
      %p42 = pneg %p36
      %p43 = scmp.eq.s32.totalorder %s27, 1
      %p44 = por %p42, %p43
      %p45 = scmp.ne.s32.totalorder %s37, %s40
      %p46 = scmp.eq.s32.totalorder %s27, 0
      %p47 = por %p45, %p46
      %p48 = scmp.ne.s32.totalorder %s37, %s40
      %p49 = scmp.eq.s32.totalorder %s32, 1
      %p50 = por %p48, %p49
      %p51 = scmp.ne.s32.totalorder %s40, %s41
      %p52 = scmp.eq.s32.totalorder %s32, 0
      %p53 = por %p51, %p52
      %p54 = scmp.ne.s32.totalorder %s40, %s41
      %p55 = scmp.eq.s32.totalorder %s33, 1
      %p56 = por %p54, %p55
      %p58 = scmp.ne.s32.totalorder %s41, %s57
      %p59 = scmp.eq.s32.totalorder %s33, 0
      %p60 = por %p58, %p59
      %s62 = sadd.s32 %s61, 1
      %p65 = scmp.eq.s32.totalorder %s27, 1
      %p66 = scmp.ne.s32.totalorder %s61, %s63
      %p67 = scmp.eq.s32.totalorder %s27, 0
      %p68 = por %p66, %p67
      %p69 = scmp.ne.s32.totalorder %s61, %s63
      %p70 = scmp.eq.s32.totalorder %s32, 1
      %p71 = por %p69, %p70
      %p72 = scmp.ne.s32.totalorder %s63, %s64
      %p73 = scmp.eq.s32.totalorder %s32, 0
      %p74 = por %p72, %p73
      %p75 = scmp.ne.s32.totalorder %s63, %s64
      %p76 = scmp.eq.s32.totalorder %s33, 1
      %p77 = por %p75, %p76
      %p79 = scmp.ne.s32.totalorder %s64, %s78
      %p80 = scmp.eq.s32.totalorder %s33, 0
      %p81 = por %p79, %p80
      %s83 = sadd.s32 %s82, 1
      %p86 = scmp.eq.s32.totalorder %s27, 1
      %p87 = scmp.ne.s32.totalorder %s82, %s84
      %p88 = scmp.eq.s32.totalorder %s27, 0
      %p89 = por %p87, %p88
      %p90 = scmp.ne.s32.totalorder %s82, %s84
      %p91 = scmp.eq.s32.totalorder %s32, 1
      %p92 = por %p90, %p91
      %p93 = scmp.ne.s32.totalorder %s84, %s85
      %p94 = scmp.eq.s32.totalorder %s32, 0
      %p95 = por %p93, %p94
      %p96 = scmp.ne.s32.totalorder %s84, %s85
      %p97 = scmp.eq.s32.totalorder %s33, 1
      %p98 = por %p96, %p97
      %p100 = scmp.ne.s32.totalorder %s85, %s99
      %p101 = scmp.eq.s32.totalorder %s33, 0
      %p102 = por %p100, %p101
      %s104 = sadd.s32 %s103, 1
      %p107 = scmp.eq.s32.totalorder %s27, 1
      %p108 = scmp.ne.s32.totalorder %s103, %s105
      %p109 = scmp.eq.s32.totalorder %s27, 0
      %p110 = por %p108, %p109
      %p111 = scmp.ne.s32.totalorder %s103, %s105
      %p112 = scmp.eq.s32.totalorder %s32, 1
      %p113 = por %p111, %p112
      %p114 = scmp.ne.s32.totalorder %s105, %s106
      %p115 = scmp.eq.s32.totalorder %s32, 0
      %p116 = por %p114, %p115
      %p117 = scmp.ne.s32.totalorder %s105, %s106
      %p118 = scmp.eq.s32.totalorder %s33, 1
      %p119 = por %p117, %p118
      %p121 = scmp.ne.s32.totalorder %s106, %s120
      %p122 = scmp.eq.s32.totalorder %s33, 0
      %p123 = por %p121, %p122
      %s125 = sadd.s32 %s124, 1
      %p128 = scmp.eq.s32.totalorder %s27, 1
      %p129 = scmp.ne.s32.totalorder %s124, %s126
      %p130 = scmp.eq.s32.totalorder %s27, 0
      %p131 = por %p129, %p130
      %p132 = scmp.ne.s32.totalorder %s124, %s126
      %p133 = scmp.eq.s32.totalorder %s32, 1
      %p134 = por %p132, %p133
      %p135 = scmp.ne.s32.totalorder %s126, %s127
      %p136 = scmp.eq.s32.totalorder %s32, 0
      %p137 = por %p135, %p136
      %p138 = scmp.ne.s32.totalorder %s126, %s127
      %p139 = scmp.eq.s32.totalorder %s33, 1
      %p140 = por %p138, %p139
      %p142 = scmp.ne.s32.totalorder %s127, %s141
      %p143 = scmp.eq.s32.totalorder %s33, 0
      %p144 = por %p142, %p143
      %s146 = sadd.s32 %s145, 1
      %p149 = scmp.eq.s32.totalorder %s27, 1
      %p150 = scmp.ne.s32.totalorder %s145, %s147
      %p151 = scmp.eq.s32.totalorder %s27, 0
      %p152 = por %p150, %p151
      %p153 = scmp.ne.s32.totalorder %s145, %s147
      %p154 = scmp.eq.s32.totalorder %s32, 1
      %p155 = por %p153, %p154
      %p156 = scmp.ne.s32.totalorder %s147, %s148
      %p157 = scmp.eq.s32.totalorder %s32, 0
      %p158 = por %p156, %p157
      %p159 = scmp.ne.s32.totalorder %s147, %s148
      %p160 = scmp.eq.s32.totalorder %s33, 1
      %p161 = por %p159, %p160
      %p163 = scmp.ne.s32.totalorder %s148, %s162
      %p164 = scmp.eq.s32.totalorder %s33, 0
      %p165 = por %p163, %p164
      %s167 = sadd.s32 %s166, 1
      %p170 = scmp.eq.s32.totalorder %s27, 1
      %p171 = scmp.ne.s32.totalorder %s166, %s168
      %p172 = scmp.eq.s32.totalorder %s27, 0
      %p173 = por %p171, %p172
      %p174 = scmp.ne.s32.totalorder %s166, %s168
      %p175 = scmp.eq.s32.totalorder %s32, 1
      %p176 = por %p174, %p175
      %p177 = scmp.ne.s32.totalorder %s168, %s169
      %p178 = scmp.eq.s32.totalorder %s32, 0
      %p179 = por %p177, %p178
      %p180 = scmp.ne.s32.totalorder %s168, %s169
      %p181 = scmp.eq.s32.totalorder %s33, 1
      %p182 = por %p180, %p181
      %p184 = scmp.ne.s32.totalorder %s169, %s183
      %p185 = scmp.eq.s32.totalorder %s33, 0
      %p186 = por %p184, %p185
      %s188 = sadd.s32 %s187, 1
      %p191 = scmp.eq.s32.totalorder %s27, 1
      %p192 = scmp.ne.s32.totalorder %s187, %s189
      %p193 = scmp.eq.s32.totalorder %s27, 0
      %p194 = por %p192, %p193
      %p195 = scmp.ne.s32.totalorder %s187, %s189
      %p196 = scmp.eq.s32.totalorder %s32, 1
      %p197 = por %p195, %p196
      %p198 = scmp.ne.s32.totalorder %s189, %s190
      %p199 = scmp.eq.s32.totalorder %s32, 0
      %p200 = por %p198, %p199
      %p201 = scmp.ne.s32.totalorder %s189, %s190
      %p202 = scmp.eq.s32.totalorder %s33, 1
      %p203 = por %p201, %p202
      %p205 = scmp.ne.s32.totalorder %s190, %s204
      %p206 = scmp.eq.s32.totalorder %s33, 0
      %p207 = por %p205, %p206
      %s209 = sadd.s32 %s208, 1
      %p212 = scmp.eq.s32.totalorder %s27, 1
      %p213 = scmp.ne.s32.totalorder %s208, %s210
      %p214 = scmp.eq.s32.totalorder %s27, 0
      %p215 = por %p213, %p214
      %p216 = scmp.ne.s32.totalorder %s208, %s210
      %p217 = scmp.eq.s32.totalorder %s32, 1
      %p218 = por %p216, %p217
      %p219 = scmp.ne.s32.totalorder %s210, %s211
      %p220 = scmp.eq.s32.totalorder %s32, 0
      %p221 = por %p219, %p220
      %p222 = scmp.ne.s32.totalorder %s210, %s211
      %p223 = scmp.eq.s32.totalorder %s33, 1
      %p224 = por %p222, %p223
      %p226 = scmp.ne.s32.totalorder %s211, %s225
      %p227 = scmp.eq.s32.totalorder %s33, 0
      %p228 = por %p226, %p227
      %s230 = sadd.s32 %s229, 1
      %p233 = scmp.eq.s32.totalorder %s27, 1
      %p234 = scmp.ne.s32.totalorder %s229, %s231
      %p235 = scmp.eq.s32.totalorder %s27, 0
      %p236 = por %p234, %p235
      %p237 = scmp.ne.s32.totalorder %s229, %s231
      %p238 = scmp.eq.s32.totalorder %s32, 1
      %p239 = por %p237, %p238
      %p240 = scmp.ne.s32.totalorder %s231, %s232
      %p241 = scmp.eq.s32.totalorder %s32, 0
      %p242 = por %p240, %p241
      %p243 = scmp.ne.s32.totalorder %s231, %s232
      %p244 = scmp.eq.s32.totalorder %s33, 1
      %p245 = por %p243, %p244
      %p247 = scmp.ne.s32.totalorder %s232, %s246
      %p248 = scmp.eq.s32.totalorder %s33, 0
      %p249 = por %p247, %p248
      %s251 = sadd.s32 %s250, 1
      %p254 = scmp.eq.s32.totalorder %s27, 1
      %p255 = scmp.ne.s32.totalorder %s250, %s252
      %p256 = scmp.eq.s32.totalorder %s27, 0
      %p257 = por %p255, %p256
      %p258 = scmp.ne.s32.totalorder %s250, %s252
      %p259 = scmp.eq.s32.totalorder %s32, 1
      %p260 = por %p258, %p259
      %p261 = scmp.ne.s32.totalorder %s252, %s253
      %p262 = scmp.eq.s32.totalorder %s32, 0
      %p263 = por %p261, %p262
      %p264 = scmp.ne.s32.totalorder %s252, %s253
      %p265 = scmp.eq.s32.totalorder %s33, 1
      %p266 = por %p264, %p265
      %p268 = scmp.ne.s32.totalorder %s253, %s267
      %p269 = scmp.eq.s32.totalorder %s33, 0
      %p270 = por %p268, %p269
      %s272 = sadd.s32 %s271, 1
      %p275 = scmp.eq.s32.totalorder %s27, 1
      %p276 = scmp.ne.s32.totalorder %s271, %s273
      %p277 = scmp.eq.s32.totalorder %s27, 0
      %p278 = por %p276, %p277
      %p279 = scmp.ne.s32.totalorder %s271, %s273
      %p280 = scmp.eq.s32.totalorder %s32, 1
      %p281 = por %p279, %p280
      %p282 = scmp.ne.s32.totalorder %s273, %s274
      %p283 = scmp.eq.s32.totalorder %s32, 0
      %p284 = por %p282, %p283
      %p285 = scmp.ne.s32.totalorder %s273, %s274
      %p286 = scmp.eq.s32.totalorder %s33, 1
      %p287 = por %p285, %p286
      %p289 = scmp.ne.s32.totalorder %s274, %s288
      %p290 = scmp.eq.s32.totalorder %s33, 0
      %p291 = por %p289, %p290
      %s293 = sadd.s32 %s292, 1
      %p296 = scmp.eq.s32.totalorder %s27, 1
      %p297 = scmp.ne.s32.totalorder %s292, %s294
      %p298 = scmp.eq.s32.totalorder %s27, 0
      %p299 = por %p297, %p298
      %p300 = scmp.ne.s32.totalorder %s292, %s294
      %p301 = scmp.eq.s32.totalorder %s32, 1
      %p302 = por %p300, %p301
      %p303 = scmp.ne.s32.totalorder %s294, %s295
      %p304 = scmp.eq.s32.totalorder %s32, 0
      %p305 = por %p303, %p304
      %p306 = scmp.ne.s32.totalorder %s294, %s295
      %p307 = scmp.eq.s32.totalorder %s33, 1
      %p308 = por %p306, %p307
      %p310 = scmp.ne.s32.totalorder %s295, %s309
      %p311 = scmp.eq.s32.totalorder %s33, 0
      %p312 = por %p310, %p311
      %s313 = ssub.s32 %s27, %s34
      %p314 = scmp.eq.s32.totalorder %s313, 0
      %s316 = sadd.s32 %s315, 1
      %s317 = scalar_select %p314, %s315, %s316
      %p320 = pneg %p314
      %p321 = scmp.eq.s32.totalorder %s27, 1
      %p322 = por %p320, %p321
      %p323 = scmp.ne.s32.totalorder %s315, %s318
      %p324 = scmp.eq.s32.totalorder %s27, 0
      %p325 = por %p323, %p324
      %p326 = scmp.ne.s32.totalorder %s315, %s318
      %p327 = scmp.eq.s32.totalorder %s32, 1
      %p328 = por %p326, %p327
      %p329 = scmp.ne.s32.totalorder %s318, %s319
      %p330 = scmp.eq.s32.totalorder %s32, 0
      %p331 = por %p329, %p330
      %p332 = scmp.ne.s32.totalorder %s318, %s319
      %p333 = scmp.eq.s32.totalorder %s33, 1
      %p334 = por %p332, %p333
      %p336 = scmp.ne.s32.totalorder %s319, %s335
      %p337 = scmp.eq.s32.totalorder %s33, 0
      %p338 = por %p336, %p337
      %p339 = scmp.le.s32.totalorder 1, %s27
      %p340 = scmp.lt.s32.totalorder %s27, 3
      %p341 = pnand %p339, %p340
      %p342 = pneg %p341
      // Predicated region
      $region9: #{tpu_custom_call.1} parent=5 // pred_check
        _
      $region10: #{tpu_custom_call.1} parent=5 // pred_check_branch
        %344 = sbr.rel (%p341) target = $region12
      $region11: #{tpu_custom_call.1} parent=5 // pred_region
        %s345 = ssub.s32 %s27, 1
        // Predicated region
        $region13: #{tpu_custom_call.1} parent=11 // pred_check
          %p346 = pneg %p74
        $region14: #{tpu_custom_call.1} parent=11 // pred_check_branch
          %348 = sbr.rel (%p346) target = $region16
        $region15: #{tpu_custom_call.1} parent=11 // pred_region
          %s350 = ssub.s32 3072, 3072
          %351 = vsyncadd [#allocation6], %s350
          %s352 = sshll.u32 [#allocation5], 4
          %s353 = int_to_ptr.vmem [resolvable:$true] %s352
          %358 = dma.hbm_to_vmem [thread:$0]  %s1, 3072, %s353, [#allocation6], 192, 192, 12
        $region16: #{tpu_custom_call.1} parent=11 // pred_fallthru
          _
        // Predicated region
        $region17: #{tpu_custom_call.1} parent=11 // pred_check
          %p359 = pneg %p95
        $region18: #{tpu_custom_call.1} parent=11 // pred_check_branch
          %361 = sbr.rel (%p359) target = $region20
        $region19: #{tpu_custom_call.1} parent=11 // pred_region
          _
        $region20: #{tpu_custom_call.1} parent=11 // pred_fallthru
          _
        // Predicated region
        $region21: #{tpu_custom_call.1} parent=11 // pred_check
          %p362 = pneg %p116
        $region22: #{tpu_custom_call.1} parent=11 // pred_check_branch
          %364 = sbr.rel (%p362) target = $region24
        $region23: #{tpu_custom_call.1} parent=11 // pred_region
          %s366 = ssub.s32 1024, 1024
          %367 = vsyncadd [#allocation6], %s366
          %s368 = sshll.u32 [#allocation7], 4
          %s369 = int_to_ptr.vmem [resolvable:$true] %s368
          %374 = dma.hbm_to_vmem [thread:$0]  %s3, 1024, %s369, [#allocation6], 64, 64, 4
        $region24: #{tpu_custom_call.1} parent=11 // pred_fallthru
          _
        // Predicated region
        $region25: #{tpu_custom_call.1} parent=11 // pred_check
          %p375 = pneg %p137
        $region26: #{tpu_custom_call.1} parent=11 // pred_check_branch
          %377 = sbr.rel (%p375) target = $region28
        $region27: #{tpu_custom_call.1} parent=11 // pred_region
          _
        $region28: #{tpu_custom_call.1} parent=11 // pred_fallthru
          _
        // Predicated region
        $region29: #{tpu_custom_call.1} parent=11 // pred_check
          %p378 = pneg %p158
        $region30: #{tpu_custom_call.1} parent=11 // pred_check_branch
          %380 = sbr.rel (%p378) target = $region32
        $region31: #{tpu_custom_call.1} parent=11 // pred_region
          _
        $region32: #{tpu_custom_call.1} parent=11 // pred_fallthru
          _
        // Predicated region
        $region33: #{tpu_custom_call.1} parent=11 // pred_check
          %p381 = pneg %p179
        $region34: #{tpu_custom_call.1} parent=11 // pred_check_branch
          %383 = sbr.rel (%p381) target = $region36
        $region35: #{tpu_custom_call.1} parent=11 // pred_region
          _
        $region36: #{tpu_custom_call.1} parent=11 // pred_fallthru
          _
        // Predicated region
        $region37: #{tpu_custom_call.1} parent=11 // pred_check
          %p384 = pneg %p200
        $region38: #{tpu_custom_call.1} parent=11 // pred_check_branch
          %386 = sbr.rel (%p384) target = $region40
        $region39: #{tpu_custom_call.1} parent=11 // pred_region
          %s388 = ssub.s32 2048, 2048
          %389 = vsyncadd [#allocation9], %s388
          %s390 = sshll.u32 [#allocation8], 4
          %s391 = int_to_ptr.vmem [resolvable:$true] %s390
          %396 = dma.hbm_to_vmem [thread:$0]  %s7, 2048, %s391, [#allocation9], 128, 128, 8
        $region40: #{tpu_custom_call.1} parent=11 // pred_fallthru
          _
        // Predicated region
        $region41: #{tpu_custom_call.1} parent=11 // pred_check
          %p397 = pneg %p221
        $region42: #{tpu_custom_call.1} parent=11 // pred_check_branch
          %399 = sbr.rel (%p397) target = $region44
        $region43: #{tpu_custom_call.1} parent=11 // pred_region
          _
        $region44: #{tpu_custom_call.1} parent=11 // pred_fallthru
          _
        // Predicated region
        $region45: #{tpu_custom_call.1} parent=11 // pred_check
          %p400 = pneg %p242
        $region46: #{tpu_custom_call.1} parent=11 // pred_check_branch
          %402 = sbr.rel (%p400) target = $region48
        $region47: #{tpu_custom_call.1} parent=11 // pred_region
          %s404 = ssub.s32 2048, 2048
          %405 = vsyncadd [#allocation9], %s404
          %s406 = sshll.u32 [#allocation10], 4
          %s407 = int_to_ptr.vmem [resolvable:$true] %s406
          %412 = dma.hbm_to_vmem [thread:$0]  %s9, 2048, %s407, [#allocation9], 64, 64, 4
        $region48: #{tpu_custom_call.1} parent=11 // pred_fallthru
          _
        // Predicated region
        $region49: #{tpu_custom_call.1} parent=11 // pred_check
          %p413 = pneg %p263
        $region50: #{tpu_custom_call.1} parent=11 // pred_check_branch
          %415 = sbr.rel (%p413) target = $region52
        $region51: #{tpu_custom_call.1} parent=11 // pred_region
          _
        $region52: #{tpu_custom_call.1} parent=11 // pred_fallthru
          _
        // Predicated region
        $region53: #{tpu_custom_call.1} parent=11 // pred_check
          %p416 = pneg %p284
        $region54: #{tpu_custom_call.1} parent=11 // pred_check_branch
          %418 = sbr.rel (%p416) target = $region56
        $region55: #{tpu_custom_call.1} parent=11 // pred_region
          _
        $region56: #{tpu_custom_call.1} parent=11 // pred_fallthru
          _
        // Predicated region
        $region57: #{tpu_custom_call.1} parent=11 // pred_check
          %p419 = pneg %p305
        $region58: #{tpu_custom_call.1} parent=11 // pred_check_branch
          %421 = sbr.rel (%p419) target = $region60
        $region59: #{tpu_custom_call.1} parent=11 // pred_region
          _
        $region60: #{tpu_custom_call.1} parent=11 // pred_fallthru
          _
      $region12: #{tpu_custom_call.1} parent=5 // pred_fallthru
        _
      %p422 = scmp.lt.s32.totalorder %s27, 2
      // Predicated region
      $region61: #{tpu_custom_call.1} parent=5 // pred_check
        %p423 = pneg %p422
      $region62: #{tpu_custom_call.1} parent=5 // pred_check_branch
        %425 = sbr.rel (%p423) target = $region64
      $region63: #{tpu_custom_call.1} parent=5 // pred_region
        // Predicated region
        $region65: #{tpu_custom_call.1} parent=63 // pred_check
          %p426 = pneg %p47
        $region66: #{tpu_custom_call.1} parent=63 // pred_check_branch
          %428 = sbr.rel (%p426) target = $region68
        $region67: #{tpu_custom_call.1} parent=63 // pred_region
          %s429 = sand.u32 %s37, 1
          %s430 = scalar_lea.sflag [#allocation3], %s429
          %s431 = sand.u32 %s37, 1
          %s432 = smul.addr %s431, 4
          %s433 = scalar_lea.vmem [#allocation2], %s432
          %s435 = ssub.s32 64, 64
          %436 = vsyncadd %s430, %s435
          %s437 = smul.addr %s27, 64
          %s438 = scalar_lea.hbm %s0, %s437
          %s440 = sshll.u32 %s433, 4
          %s441 = int_to_ptr.vmem [resolvable:$true] %s440
          %443 = dma.hbm_to_vmem [thread:$0]  %s438, 64, %s441, %s430
        $region68: #{tpu_custom_call.1} parent=63 // pred_fallthru
          _
      $region64: #{tpu_custom_call.1} parent=5 // pred_fallthru
        _
      %p444 = scmp.le.s32.totalorder 1, %s27
      %p445 = scmp.lt.s32.totalorder %s27, 3
      %p446 = pnand %p444, %p445
      %p447 = pneg %p446
      // Predicated region
      $region69: #{tpu_custom_call.1} parent=5 // pred_check
        _
      $region70: #{tpu_custom_call.1} parent=5 // pred_check_branch
        %449 = sbr.rel (%p446) target = $region72
      $region71: #{tpu_custom_call.1} parent=5 // pred_region
        %s450 = ssub.s32 %s27, 1
        %s451 = sand.u32 %s40, 1
        %s452 = scalar_lea.sflag [#allocation3], %s451
        %s453 = sand.u32 %s40, 1
        %s454 = smul.addr %s453, 4
        %s455 = scalar_lea.vmem [#allocation2], %s454
        // Predicated region
        $region73: #{tpu_custom_call.1} parent=71 // pred_check
          %p456 = pneg %p53
        $region74: #{tpu_custom_call.1} parent=71 // pred_check_branch
          %458 = sbr.rel (%p456) target = $region76
        $region75: #{tpu_custom_call.1} parent=71 // pred_region
          %459 = dma.done %s452, 64
        $region76: #{tpu_custom_call.1} parent=71 // pred_fallthru
          _
        // Predicated region
        $region77: #{tpu_custom_call.1} parent=71 // pred_check
          %p460 = pneg %p74
        $region78: #{tpu_custom_call.1} parent=71 // pred_check_branch
          %462 = sbr.rel (%p460) target = $region80
        $region79: #{tpu_custom_call.1} parent=71 // pred_region
          %463 = dma.done [#allocation6], 3072
        $region80: #{tpu_custom_call.1} parent=71 // pred_fallthru
          _
        // Predicated region
        $region81: #{tpu_custom_call.1} parent=71 // pred_check
          %p464 = pneg %p116
        $region82: #{tpu_custom_call.1} parent=71 // pred_check_branch
          %466 = sbr.rel (%p464) target = $region84
        $region83: #{tpu_custom_call.1} parent=71 // pred_region
          %467 = dma.done [#allocation6], 1024
        $region84: #{tpu_custom_call.1} parent=71 // pred_fallthru
          _
        // Predicated region
        $region85: #{tpu_custom_call.1} parent=71 // pred_check
          %p468 = pneg %p200
        $region86: #{tpu_custom_call.1} parent=71 // pred_check_branch
          %470 = sbr.rel (%p468) target = $region88
        $region87: #{tpu_custom_call.1} parent=71 // pred_region
          %471 = dma.done [#allocation9], 2048
        $region88: #{tpu_custom_call.1} parent=71 // pred_fallthru
          _
        // Predicated region
        $region89: #{tpu_custom_call.1} parent=71 // pred_check
          %p472 = pneg %p242
        $region90: #{tpu_custom_call.1} parent=71 // pred_check_branch
          %474 = sbr.rel (%p472) target = $region92
        $region91: #{tpu_custom_call.1} parent=71 // pred_region
          %475 = dma.done [#allocation9], 2048
        $region92: #{tpu_custom_call.1} parent=71 // pred_fallthru
          _
        %s476 = sand.u32 %s40, 1
        %s477 = scalar_lea.sflag [#allocation3], %s476
        %s478 = sand.u32 %s40, 1
        %s479 = smul.addr %s478, 4
        %s480 = scalar_lea.vmem [#allocation2], %s479
        %p481 = pneg %p53
        %p482 = pneg %p50
        %p483 = pneg %p74
        %p484 = pneg %p71
        %p485 = pneg %p95
        %p486 = pneg %p92
        %p487 = pneg %p116
        %p488 = pneg %p113
        %p489 = pneg %p137
        %p490 = pneg %p134
        %p491 = pneg %p158
        %p492 = pneg %p155
        %p493 = pneg %p179
        %p494 = pneg %p176
        %p495 = pneg %p200
        %p496 = pneg %p197
        %p497 = pneg %p221
        %p498 = pneg %p218
        %p499 = pneg %p242
        %p500 = pneg %p239
        %p501 = pneg %p263
        %p502 = pneg %p260
        %p503 = pneg %p284
        %p504 = pneg %p281
        %p505 = pneg %p305
        %p506 = pneg %p302
        %p507 = pneg %p331
        %p508 = pneg %p328
        %s509 = sand.u32 %s318, 1
        %s510 = scalar_lea.sflag [#allocation4], %s509
        %s511 = sand.u32 %s318, 1
        %s512 = smul.addr %s511, 4
        %s513 = scalar_lea.vmem [#allocation11], %s512
        %v515 = vld [vmem:[%s455] sm:$0xf]
        %v516 = vunpack.c.l.bf16 %v515
        %v517 = vld [vmem:[#allocation5] sm:$0xff]
        %v518 = vld [vmem:[#allocation5 + $0x8] sm:$0xf]
        %v519 = vld [vmem:[#allocation5 + $0xc] sm:$0xff]
        %v520 = vld [vmem:[#allocation5 + $0x14] sm:$0xf]
        %v521 = vld [vmem:[#allocation5 + $0x18] sm:$0xff]
        %v522 = vld [vmem:[#allocation5 + $0x20] sm:$0xf]
        %v523 = vld [vmem:[#allocation5 + $0x24] sm:$0xff]
        %v524 = vld [vmem:[#allocation5 + $0x2c] sm:$0xf]
        %v525 = vld [vmem:[#allocation5 + $0x30] sm:$0xff]
        %v526 = vld [vmem:[#allocation5 + $0x38] sm:$0xf]
        %v527 = vld [vmem:[#allocation5 + $0x3c] sm:$0xff]
        %v528 = vld [vmem:[#allocation5 + $0x44] sm:$0xf]
        %v529 = vld [vmem:[#allocation5 + $0x48] sm:$0xff]
        %v530 = vld [vmem:[#allocation5 + $0x50] sm:$0xf]
        %v531 = vld [vmem:[#allocation5 + $0x54] sm:$0xff]
        %v532 = vld [vmem:[#allocation5 + $0x5c] sm:$0xf]
        %v533 = vld [vmem:[#allocation5 + $0x60] sm:$0xff]
        %v534 = vld [vmem:[#allocation5 + $0x68] sm:$0xf]
        %v535 = vld [vmem:[#allocation5 + $0x6c] sm:$0xff]
        %v536 = vld [vmem:[#allocation5 + $0x74] sm:$0xf]
        %v537 = vld [vmem:[#allocation5 + $0x78] sm:$0xff]
        %v538 = vld [vmem:[#allocation5 + $0x80] sm:$0xf]
        %v539 = vld [vmem:[#allocation5 + $0x84] sm:$0xff]
        %v540 = vld [vmem:[#allocation5 + $0x8c] sm:$0xf]
        %v541 = vld [vmem:[#allocation5 + $0x90] sm:$0xff]
        %v542 = vld [vmem:[#allocation5 + $0x98] sm:$0xf]
        %v543 = vld [vmem:[#allocation5 + $0x9c] sm:$0xff]
        %v544 = vld [vmem:[#allocation5 + $0xa4] sm:$0xf]
        %v545 = vld [vmem:[#allocation5 + $0xa8] sm:$0xff]
        %v546 = vld [vmem:[#allocation5 + $0xb0] sm:$0xf]
        %v547 = vld [vmem:[#allocation5 + $0xb4] sm:$0xff]
        %v548 = vld [vmem:[#allocation5 + $0xbc] sm:$0xf]
        %v549 = vld [vmem:[%s2] sm:$0x7]
        %v551 = vlaneseq
        %v552 = vshrl.u32 %v551, 7
        %v553 = vsub.s32 0, %v552
        %v554 = vrot.slane %v549, %v553
        %v555 = vlaneseq
        %v556 = vshrl.u32 %v555, 7
        %v557 = vsub.s32 1, %v556
        %v558 = vrot.slane %v549, %v557
        %v559 = vlaneseq
        %v560 = vshrl.u32 %v559, 7
        %v561 = vsub.s32 2, %v560
        %v562 = vrot.slane %v549, %v561
        %v598 = vunpack.c.l.b16 %v517
        %v599 = vunpack.c.h.b16 %v517
        %v600 = vunpack.c.l.b16 %v518
        %v601 = vunpack.c.l.b16 %v519
        %v602 = vunpack.c.h.b16 %v519
        %v603 = vunpack.c.l.b16 %v520
        %v604 = vunpack.c.l.b16 %v521
        %v605 = vunpack.c.h.b16 %v521
        %v606 = vunpack.c.l.b16 %v522
        %v607 = vunpack.c.l.b16 %v523
        %v608 = vunpack.c.h.b16 %v523
        %v609 = vunpack.c.l.b16 %v524
        %v610 = vunpack.c.l.b16 %v525
        %v611 = vunpack.c.h.b16 %v525
        %v612 = vunpack.c.l.b16 %v526
        %v613 = vunpack.c.l.b16 %v527
        %v614 = vunpack.c.h.b16 %v527
        %v615 = vunpack.c.l.b16 %v528
        %v616 = vunpack.c.l.b16 %v529
        %v617 = vunpack.c.h.b16 %v529
        %v618 = vunpack.c.l.b16 %v530
        %v619 = vunpack.c.l.b16 %v531
        %v620 = vunpack.c.h.b16 %v531
        %v621 = vunpack.c.l.b16 %v532
        %v622 = vunpack.c.l.b16 %v533
        %v623 = vunpack.c.h.b16 %v533
        %v624 = vunpack.c.l.b16 %v534
        %v625 = vunpack.c.l.b16 %v535
        %v626 = vunpack.c.h.b16 %v535
        %v627 = vunpack.c.l.b16 %v536
        %v628 = vunpack.c.l.b16 %v537
        %v629 = vunpack.c.h.b16 %v537
        %v630 = vunpack.c.l.b16 %v538
        %v631 = vunpack.c.l.b16 %v539
        %v632 = vunpack.c.h.b16 %v539
        %v633 = vunpack.c.l.b16 %v540
        %v634 = vunpack.c.l.b16 %v541
        %v635 = vunpack.c.h.b16 %v541
        %v636 = vunpack.c.l.b16 %v542
        %v637 = vunpack.c.l.b16 %v543
        %v638 = vunpack.c.h.b16 %v543
        %v639 = vunpack.c.l.b16 %v544
        %v640 = vunpack.c.l.b16 %v545
        %v641 = vunpack.c.h.b16 %v545
        %v642 = vunpack.c.l.b16 %v546
        %v643 = vunpack.c.l.b16 %v547
        %v644 = vunpack.c.h.b16 %v547
        %v645 = vunpack.c.l.b16 %v548
        %v646 = vpack.c.b16 %v601, %v598
        %v647 = vpack.c.b16 %v602, %v599
        %v648 = vpack.c.b16 %v603, %v600
        %v649 = vpack.c.b16 %v607, %v604
        %v650 = vpack.c.b16 %v608, %v605
        %v651 = vpack.c.b16 %v609, %v606
        %v652 = vpack.c.b16 %v613, %v610
        %v653 = vpack.c.b16 %v614, %v611
        %v654 = vpack.c.b16 %v615, %v612
        %v655 = vpack.c.b16 %v619, %v616
        %v656 = vpack.c.b16 %v620, %v617
        %v657 = vpack.c.b16 %v621, %v618
        %v658 = vpack.c.b16 %v625, %v622
        %v659 = vpack.c.b16 %v626, %v623
        %v660 = vpack.c.b16 %v627, %v624
        %v661 = vpack.c.b16 %v631, %v628
        %v662 = vpack.c.b16 %v632, %v629
        %v663 = vpack.c.b16 %v633, %v630
        %v664 = vpack.c.b16 %v637, %v634
        %v665 = vpack.c.b16 %v638, %v635
        %v666 = vpack.c.b16 %v639, %v636
        %v667 = vpack.c.b16 %v643, %v640
        %v668 = vpack.c.b16 %v644, %v641
        %v669 = vpack.c.b16 %v645, %v642
        %694 = vmatprep.subr.bf16.mxu0 %v647
        %695 = vmatpush1.bf16.msra.mxu0 %v646
        %696 = vmatprep.subr.bf16.mxu0 %v650
        %697 = vmatpush1.bf16.msra.mxu0 %v649
        %698 = vmatprep.subr.bf16.mxu0 %v653
        %699 = vmatpush1.bf16.msra.mxu0 %v652
        %700 = vmatprep.subr.bf16.mxu0 %v656
        %701 = vmatpush1.bf16.msra.mxu0 %v655
        %702 = vmatprep.subr.bf16.mxu0 %v659
        %703 = vmatpush1.bf16.msra.mxu0 %v658
        %704 = vmatprep.subr.bf16.mxu0 %v662
        %705 = vmatpush1.bf16.msra.mxu0 %v661
        %706 = vmatprep.subr.bf16.mxu0 %v665
        %707 = vmatpush1.bf16.msra.mxu0 %v664
        %708 = vmatprep.subr.bf16.mxu0 %v668
        %709 = vmatpush1.bf16.msra.mxu0 %v667
        %710 = vmatprep.subr.bf16.mxu0 0
        %711 = vmatpush1.bf16.msra.mxu0 0
        %712 = vmatprep.subr.bf16.mxu0 0
        %713 = vmatpush1.bf16.msra.mxu0 0
        %714 = vmatprep.subr.bf16.mxu0 0
        %715 = vmatpush1.bf16.msra.mxu0 0
        %716 = vmatprep.subr.bf16.mxu0 0
        %717 = vmatpush1.bf16.msra.mxu0 0
        %718 = vmatprep.subr.bf16.mxu0 0
        %719 = vmatpush1.bf16.msra.mxu0 0
        %720 = vmatprep.subr.bf16.mxu0 0
        %721 = vmatpush1.bf16.msra.mxu0 0
        %722 = vmatprep.subr.bf16.mxu0 0
        %723 = vmatpush1.bf16.msra.mxu0 0
        %724 = vmatprep.subr.bf16.mxu0 0
        %725 = vmatpush1.bf16.msra.mxu0 0
        %726 = vmatprep.mubr.bf16.mxu0 0
        %727 = vmatmul.mubr.bf16.gmra.mrb[0].mxu0 %v515
        %v728 = vpop.f32.mrb[0].mxu0
        %v729 = vadd.f32 %v554, %v728
        %v730 = vpop.f32.mrb[0].mxu0
        %v731 = vadd.f32 %v558, %v730
        %v732 = vpop.f32.mrb[0].mxu0
        %v733 = vpop.f32.mrb[0].mxu0
        %734 = vdwg.mxu0
        %735 = vmatprep.subr.bf16.mxu0 0
        %736 = vmatpush1.bf16.msra.mxu0 %v648
        %737 = vmatprep.subr.bf16.mxu0 0
        %738 = vmatpush1.bf16.msra.mxu0 %v651
        %739 = vmatprep.subr.bf16.mxu0 0
        %740 = vmatpush1.bf16.msra.mxu0 %v654
        %741 = vmatprep.subr.bf16.mxu0 0
        %742 = vmatpush1.bf16.msra.mxu0 %v657
        %743 = vmatprep.subr.bf16.mxu0 0
        %744 = vmatpush1.bf16.msra.mxu0 %v660
        %745 = vmatprep.subr.bf16.mxu0 0
        %746 = vmatpush1.bf16.msra.mxu0 %v663
        %747 = vmatprep.subr.bf16.mxu0 0
        %748 = vmatpush1.bf16.msra.mxu0 %v666
        %749 = vmatprep.subr.bf16.mxu0 0
        %750 = vmatpush1.bf16.msra.mxu0 %v669
        %751 = vmatprep.subr.bf16.mxu0 0
        %752 = vmatpush1.bf16.msra.mxu0 0
        %753 = vmatprep.subr.bf16.mxu0 0
        %754 = vmatpush1.bf16.msra.mxu0 0
        %755 = vmatprep.subr.bf16.mxu0 0
        %756 = vmatpush1.bf16.msra.mxu0 0
        %757 = vmatprep.subr.bf16.mxu0 0
        %758 = vmatpush1.bf16.msra.mxu0 0
        %759 = vmatprep.subr.bf16.mxu0 0
        %760 = vmatpush1.bf16.msra.mxu0 0
        %761 = vmatprep.subr.bf16.mxu0 0
        %762 = vmatpush1.bf16.msra.mxu0 0
        %763 = vmatprep.subr.bf16.mxu0 0
        %764 = vmatpush1.bf16.msra.mxu0 0
        %765 = vmatprep.subr.bf16.mxu0 0
        %766 = vmatpush1.bf16.msra.mxu0 0
        %767 = vmatprep.mubr.bf16.mxu0 0
        %768 = vmatmul.mubr.bf16.gmra.mrb[0].mxu0 %v515
        %v769 = vpop.f32.mrb[0].mxu0
        %v770 = vadd.f32 %v562, %v769
        %v771 = vpop.f32.mrb[0].mxu0
        %v772 = vpop.f32.mrb[0].mxu0
        %v773 = vpop.f32.mrb[0].mxu0
        %774 = vdwg.mxu0
        %v775 = vlaneseq
        %v776 = vshrl.u32 %v775, 7
        %v777 = vlaneseq
        %v778 = vand.u32 %v777, 127
        %v779 = vmul.f32 %v729, 0.125
        %v780 = vpack.c.bf16 %v779, %v779
        %v781 = vpack.c.bf16 %v731, %v731
        %v782 = vpack.c.bf16 %v770, %v770
        %vm783 = vcmask 523264
        %v785 = vsel %vm783, %v780, 0
        %v788 = vsel %vm783, %v781, 0
        %790 = vmatprep.subr.bf16.mxu0 0
        %791 = vmatpush1.bf16.xpose.msra.mxu0 %v788
        %792 = vmatprep.subr.bf16.mxu0 0
        %793 = vmatpush1.bf16.xpose.msra.mxu0 0
        %794 = vmatprep.subr.bf16.mxu0 0
        %795 = vmatpush1.bf16.xpose.msra.mxu0 0
        %796 = vmatprep.subr.bf16.mxu0 0
        %797 = vmatpush1.bf16.xpose.msra.mxu0 0
        %798 = vmatprep.subr.bf16.mxu0 0
        %799 = vmatpush1.bf16.xpose.msra.mxu0 0
        %800 = vmatprep.subr.bf16.mxu0 0
        %801 = vmatpush1.bf16.xpose.msra.mxu0 0
        %802 = vmatprep.subr.bf16.mxu0 0
        %803 = vmatpush1.bf16.xpose.msra.mxu0 0
        %804 = vmatprep.subr.bf16.mxu0 0
        %805 = vmatpush1.bf16.xpose.msra.mxu0 0
        %806 = vmatprep.subr.bf16.mxu0 0
        %807 = vmatpush1.bf16.xpose.msra.mxu0 0
        %808 = vmatprep.subr.bf16.mxu0 0
        %809 = vmatpush1.bf16.xpose.msra.mxu0 0
        %810 = vmatprep.subr.bf16.mxu0 0
        %811 = vmatpush1.bf16.xpose.msra.mxu0 0
        %812 = vmatprep.subr.bf16.mxu0 0
        %813 = vmatpush1.bf16.xpose.msra.mxu0 0
        %814 = vmatprep.subr.bf16.mxu0 0
        %815 = vmatpush1.bf16.xpose.msra.mxu0 0
        %816 = vmatprep.subr.bf16.mxu0 0
        %817 = vmatpush1.bf16.xpose.msra.mxu0 0
        %818 = vmatprep.subr.bf16.mxu0 0
        %819 = vmatpush1.bf16.xpose.msra.mxu0 0
        %820 = vmatprep.subr.bf16.mxu0 0
        %821 = vmatpush1.bf16.xpose.msra.mxu0 0
        %822 = vmatprep.mubr.bf16.mxu0 0
        %823 = vmatmul.mubr.bf16.gmra.mrb[0].mxu0 %v785
        %v824 = vpop.f32.mrb[0].mxu0
        %v825 = vadd.f32 0.0, %v824
        %v826 = vpop.f32.mrb[0].mxu0
        %v827 = vpop.f32.mrb[0].mxu0
        %v828 = vpop.f32.mrb[0].mxu0
        %829 = vdwg.mxu0
        %vm830 = vcmp.gt.s32.totalorder %v778, %v776
        %v831 = vsel %vm830, -1e+30, %v825
        %vm832 = vcmask 64512
        %v833 = vsel %vm832, %v831, -inf
        %834 = vmax.xlane.f32.xlu0 %v833
        %v835 = vpop.xlane.xlu0 %834
        %v836 = vsub.f32 %v831, %v835
        %v837 = vmul.f32 %v836, 1.442695
        %v838 = vpow.pop %v837
        %v839 = vsel %vm832, %v838, 0.0
        %840 = vadd.xlane.f32.xlu0 %v839
        %v841 = vpop.xlane.xlu0 %840
        %v842 = vrcp.pop %v841
        %v843 = vmul.f32 %v838, %v842
        %v844 = vpack.c.bf16 %v843, %v843
        %v846 = vsel %vm832, %v844, 0
        %vm848 = vcmask 1043456
        %v850 = vsel %vm848, %v782, 0
        %852 = vmatprep.subr.bf16.mxu0 0
        %853 = vmatpush1.bf16.msra.mxu0 %v850
        %854 = vmatprep.subr.bf16.mxu0 0
        %855 = vmatpush1.bf16.msra.mxu0 0
        %856 = vmatprep.subr.bf16.mxu0 0
        %857 = vmatpush1.bf16.msra.mxu0 0
        %858 = vmatprep.subr.bf16.mxu0 0
        %859 = vmatpush1.bf16.msra.mxu0 0
        %860 = vmatprep.subr.bf16.mxu0 0
        %861 = vmatpush1.bf16.msra.mxu0 0
        %862 = vmatprep.subr.bf16.mxu0 0
        %863 = vmatpush1.bf16.msra.mxu0 0
        %864 = vmatprep.subr.bf16.mxu0 0
        %865 = vmatpush1.bf16.msra.mxu0 0
        %866 = vmatprep.subr.bf16.mxu0 0
        %867 = vmatpush1.bf16.msra.mxu0 0
        %868 = vmatprep.subr.bf16.mxu0 0
        %869 = vmatpush1.bf16.msra.mxu0 0
        %870 = vmatprep.subr.bf16.mxu0 0
        %871 = vmatpush1.bf16.msra.mxu0 0
        %872 = vmatprep.subr.bf16.mxu0 0
        %873 = vmatpush1.bf16.msra.mxu0 0
        %874 = vmatprep.subr.bf16.mxu0 0
        %875 = vmatpush1.bf16.msra.mxu0 0
        %876 = vmatprep.subr.bf16.mxu0 0
        %877 = vmatpush1.bf16.msra.mxu0 0
        %878 = vmatprep.subr.bf16.mxu0 0
        %879 = vmatpush1.bf16.msra.mxu0 0
        %880 = vmatprep.subr.bf16.mxu0 0
        %881 = vmatpush1.bf16.msra.mxu0 0
        %882 = vmatprep.subr.bf16.mxu0 0
        %883 = vmatpush1.bf16.msra.mxu0 0
        %884 = vmatprep.mubr.bf16.mxu0 0
        %885 = vmatmul.mubr.bf16.gmra.mrb[0].mxu0 %v846
        %v886 = vpop.f32.mrb[0].mxu0
        %v887 = vadd.f32 0.0, %v886
        %v888 = vpop.f32.mrb[0].mxu0
        %v889 = vpop.f32.mrb[0].mxu0
        %v890 = vpop.f32.mrb[0].mxu0
        %891 = vdwg.mxu0
        %893 = vrot.lane.b32.xlu0 %v780, 64
        %v894 = vpop.permute.xlu0 %893
        %896 = vrot.lane.b32.xlu0 %v781, 64
        %v897 = vpop.permute.xlu0 %896
        %v899 = vsel %vm783, %v894, 0
        %v902 = vsel %vm783, %v897, 0
        %904 = vmatprep.subr.bf16.mxu0 0
        %905 = vmatpush1.bf16.xpose.msra.mxu0 %v902
        %906 = vmatprep.subr.bf16.mxu0 0
        %907 = vmatpush1.bf16.xpose.msra.mxu0 0
        %908 = vmatprep.subr.bf16.mxu0 0
        %909 = vmatpush1.bf16.xpose.msra.mxu0 0
        %910 = vmatprep.subr.bf16.mxu0 0
        %911 = vmatpush1.bf16.xpose.msra.mxu0 0
        %912 = vmatprep.subr.bf16.mxu0 0
        %913 = vmatpush1.bf16.xpose.msra.mxu0 0
        %914 = vmatprep.subr.bf16.mxu0 0
        %915 = vmatpush1.bf16.xpose.msra.mxu0 0
        %916 = vmatprep.subr.bf16.mxu0 0
        %917 = vmatpush1.bf16.xpose.msra.mxu0 0
        %918 = vmatprep.subr.bf16.mxu0 0
        %919 = vmatpush1.bf16.xpose.msra.mxu0 0
        %920 = vmatprep.subr.bf16.mxu0 0
        %921 = vmatpush1.bf16.xpose.msra.mxu0 0
        %922 = vmatprep.subr.bf16.mxu0 0
        %923 = vmatpush1.bf16.xpose.msra.mxu0 0
        %924 = vmatprep.subr.bf16.mxu0 0
        %925 = vmatpush1.bf16.xpose.msra.mxu0 0
        %926 = vmatprep.subr.bf16.mxu0 0
        %927 = vmatpush1.bf16.xpose.msra.mxu0 0
        %928 = vmatprep.subr.bf16.mxu0 0
        %929 = vmatpush1.bf16.xpose.msra.mxu0 0
        %930 = vmatprep.subr.bf16.mxu0 0
        %931 = vmatpush1.bf16.xpose.msra.mxu0 0
        %932 = vmatprep.subr.bf16.mxu0 0
        %933 = vmatpush1.bf16.xpose.msra.mxu0 0
        %934 = vmatprep.subr.bf16.mxu0 0
        %935 = vmatpush1.bf16.xpose.msra.mxu0 0
        %936 = vmatprep.mubr.bf16.mxu0 0
        %937 = vmatmul.mubr.bf16.gmra.mrb[0].mxu0 %v899
        %v938 = vpop.f32.mrb[0].mxu0
        %v939 = vadd.f32 0.0, %v938
        %v940 = vpop.f32.mrb[0].mxu0
        %v941 = vpop.f32.mrb[0].mxu0
        %v942 = vpop.f32.mrb[0].mxu0
        %943 = vdwg.mxu0
        %v944 = vsel %vm830, -1e+30, %v939
        %v945 = vsel %vm832, %v944, -inf
        %946 = vmax.xlane.f32.xlu0 %v945
        %v947 = vpop.xlane.xlu0 %946
        %v948 = vsub.f32 %v944, %v947
        %v949 = vmul.f32 %v948, 1.442695
        %v950 = vpow.pop %v949
        %v951 = vsel %vm832, %v950, 0.0
        %952 = vadd.xlane.f32.xlu0 %v951
        %v953 = vpop.xlane.xlu0 %952
        %v954 = vrcp.pop %v953
        %v955 = vmul.f32 %v950, %v954
        %v956 = vpack.c.bf16 %v955, %v955
        %958 = vrot.lane.b32.xlu0 %v782, 64
        %v959 = vpop.permute.xlu0 %958
        %v961 = vsel %vm832, %v956, 0
        %v964 = vsel %vm848, %v959, 0
        %966 = vmatprep.subr.bf16.mxu0 0
        %967 = vmatpush1.bf16.msra.mxu0 %v964
        %968 = vmatprep.subr.bf16.mxu0 0
        %969 = vmatpush1.bf16.msra.mxu0 0
        %970 = vmatprep.subr.bf16.mxu0 0
        %971 = vmatpush1.bf16.msra.mxu0 0
        %972 = vmatprep.subr.bf16.mxu0 0
        %973 = vmatpush1.bf16.msra.mxu0 0
        %974 = vmatprep.subr.bf16.mxu0 0
        %975 = vmatpush1.bf16.msra.mxu0 0
        %976 = vmatprep.subr.bf16.mxu0 0
        %977 = vmatpush1.bf16.msra.mxu0 0
        %978 = vmatprep.subr.bf16.mxu0 0
        %979 = vmatpush1.bf16.msra.mxu0 0
        %980 = vmatprep.subr.bf16.mxu0 0
        %981 = vmatpush1.bf16.msra.mxu0 0
        %982 = vmatprep.subr.bf16.mxu0 0
        %983 = vmatpush1.bf16.msra.mxu0 0
        %984 = vmatprep.subr.bf16.mxu0 0
        %985 = vmatpush1.bf16.msra.mxu0 0
        %986 = vmatprep.subr.bf16.mxu0 0
        %987 = vmatpush1.bf16.msra.mxu0 0
        %988 = vmatprep.subr.bf16.mxu0 0
        %989 = vmatpush1.bf16.msra.mxu0 0
        %990 = vmatprep.subr.bf16.mxu0 0
        %991 = vmatpush1.bf16.msra.mxu0 0
        %992 = vmatprep.subr.bf16.mxu0 0
        %993 = vmatpush1.bf16.msra.mxu0 0
        %994 = vmatprep.subr.bf16.mxu0 0
        %995 = vmatpush1.bf16.msra.mxu0 0
        %996 = vmatprep.subr.bf16.mxu0 0
        %997 = vmatpush1.bf16.msra.mxu0 0
        %998 = vmatprep.mubr.bf16.mxu0 0
        %999 = vmatmul.mubr.bf16.gmra.mrb[0].mxu0 %v961
        %v1000 = vpop.f32.mrb[0].mxu0
        %v1001 = vadd.f32 0.0, %v1000
        %v1002 = vpop.f32.mrb[0].mxu0
        %v1003 = vpop.f32.mrb[0].mxu0
        %v1004 = vpop.f32.mrb[0].mxu0
        %1005 = vdwg.mxu0
        %1007 = vrot.lane.b32.xlu0 %v1001, 64
        %v1008 = vpop.permute.xlu0 %1007
        %v1010 = vsel %vm783, %v887, %v1008
        %v1011 = vpack.c.bf16 %v1010, %v1010
        %v1012 = vld [vmem:[#allocation7] sm:$0xf]
        %v1013 = vld [vmem:[#allocation7 + $0x4] sm:$0xf]
        %v1014 = vld [vmem:[#allocation7 + $0x8] sm:$0xf]
        %v1015 = vld [vmem:[#allocation7 + $0xc] sm:$0xf]
        %v1016 = vld [vmem:[#allocation7 + $0x10] sm:$0xf]
        %v1017 = vld [vmem:[#allocation7 + $0x14] sm:$0xf]
        %v1018 = vld [vmem:[#allocation7 + $0x18] sm:$0xf]
        %v1019 = vld [vmem:[#allocation7 + $0x1c] sm:$0xf]
        %v1020 = vld [vmem:[#allocation7 + $0x20] sm:$0xf]
        %v1021 = vld [vmem:[#allocation7 + $0x24] sm:$0xf]
        %v1022 = vld [vmem:[#allocation7 + $0x28] sm:$0xf]
        %v1023 = vld [vmem:[#allocation7 + $0x2c] sm:$0xf]
        %v1024 = vld [vmem:[#allocation7 + $0x30] sm:$0xf]
        %v1025 = vld [vmem:[#allocation7 + $0x34] sm:$0xf]
        %v1026 = vld [vmem:[#allocation7 + $0x38] sm:$0xf]
        %v1027 = vld [vmem:[#allocation7 + $0x3c] sm:$0xf]
        %v1028 = vld [vmem:[%s4] sm:$0x1]
        %v1030 = vlaneseq
        %v1031 = vshrl.u32 %v1030, 7
        %v1032 = vsub.s32 0, %v1031
        %v1033 = vrot.slane %v1028, %v1032
        %v1051 = vunpack.c.l.b16 %v1012
        %v1052 = vunpack.c.l.b16 %v1013
        %v1053 = vunpack.c.l.b16 %v1014
        %v1054 = vunpack.c.l.b16 %v1015
        %v1055 = vunpack.c.l.b16 %v1016
        %v1056 = vunpack.c.l.b16 %v1017
        %v1057 = vunpack.c.l.b16 %v1018
        %v1058 = vunpack.c.l.b16 %v1019
        %v1059 = vunpack.c.l.b16 %v1020
        %v1060 = vunpack.c.l.b16 %v1021
        %v1061 = vunpack.c.l.b16 %v1022
        %v1062 = vunpack.c.l.b16 %v1023
        %v1063 = vunpack.c.l.b16 %v1024
        %v1064 = vunpack.c.l.b16 %v1025
        %v1065 = vunpack.c.l.b16 %v1026
        %v1066 = vunpack.c.l.b16 %v1027
        %v1067 = vpack.c.b16 %v1052, %v1051
        %v1068 = vpack.c.b16 %v1054, %v1053
        %v1069 = vpack.c.b16 %v1056, %v1055
        %v1070 = vpack.c.b16 %v1058, %v1057
        %v1071 = vpack.c.b16 %v1060, %v1059
        %v1072 = vpack.c.b16 %v1062, %v1061
        %v1073 = vpack.c.b16 %v1064, %v1063
        %v1074 = vpack.c.b16 %v1066, %v1065
        %1083 = vmatprep.subr.bf16.mxu0 0
        %1084 = vmatpush1.bf16.msra.mxu0 %v1067
        %1085 = vmatprep.subr.bf16.mxu0 0
        %1086 = vmatpush1.bf16.msra.mxu0 %v1068
        %1087 = vmatprep.subr.bf16.mxu0 0
        %1088 = vmatpush1.bf16.msra.mxu0 %v1069
        %1089 = vmatprep.subr.bf16.mxu0 0
        %1090 = vmatpush1.bf16.msra.mxu0 %v1070
        %1091 = vmatprep.subr.bf16.mxu0 0
        %1092 = vmatpush1.bf16.msra.mxu0 %v1071
        %1093 = vmatprep.subr.bf16.mxu0 0
        %1094 = vmatpush1.bf16.msra.mxu0 %v1072
        %1095 = vmatprep.subr.bf16.mxu0 0
        %1096 = vmatpush1.bf16.msra.mxu0 %v1073
        %1097 = vmatprep.subr.bf16.mxu0 0
        %1098 = vmatpush1.bf16.msra.mxu0 %v1074
        %1099 = vmatprep.subr.bf16.mxu0 0
        %1100 = vmatpush1.bf16.msra.mxu0 0
        %1101 = vmatprep.subr.bf16.mxu0 0
        %1102 = vmatpush1.bf16.msra.mxu0 0
        %1103 = vmatprep.subr.bf16.mxu0 0
        %1104 = vmatpush1.bf16.msra.mxu0 0
        %1105 = vmatprep.subr.bf16.mxu0 0
        %1106 = vmatpush1.bf16.msra.mxu0 0
        %1107 = vmatprep.subr.bf16.mxu0 0
        %1108 = vmatpush1.bf16.msra.mxu0 0
        %1109 = vmatprep.subr.bf16.mxu0 0
        %1110 = vmatpush1.bf16.msra.mxu0 0
        %1111 = vmatprep.subr.bf16.mxu0 0
        %1112 = vmatpush1.bf16.msra.mxu0 0
        %1113 = vmatprep.subr.bf16.mxu0 0
        %1114 = vmatpush1.bf16.msra.mxu0 0
        %1115 = vmatprep.mubr.bf16.mxu0 0
        %1116 = vmatmul.mubr.bf16.gmra.mrb[0].mxu0 %v1011
        %v1117 = vpop.f32.mrb[0].mxu0
        %v1118 = vadd.f32 %v1033, %v1117
        %v1119 = vpop.f32.mrb[0].mxu0
        %v1120 = vpop.f32.mrb[0].mxu0
        %v1121 = vpop.f32.mrb[0].mxu0
        %1122 = vdwg.mxu0
        %v1123 = vadd.f32 %v516, %v1118
        %v1124 = vld [vmem:[%s5] sm:$0x1]
        %v1125 = vld [vmem:[%s6] sm:$0x1]
        %1126 = vadd.xlane.f32.xlu0 %v1123
        %v1127 = vpop.xlane.xlu0 %1126
        %v1128 = vrcp.pop 128.0
        %v1129 = vmul.f32 %v1127, %v1128
        %v1130 = vsub.f32 %v1123, %v1129
        %v1131 = vmul.f32 %v1130, %v1130
        %1132 = vadd.xlane.f32.xlu0 %v1131
        %v1133 = vpop.xlane.xlu0 %1132
        %v1134 = vmul.f32 %v1133, %v1128
        %v1135 = vadd.f32 %v1134, 1e-05
        %v1136 = vrsqrt.pop %v1135
        %v1137 = vmul.f32 %v1130, %v1136
        %v1139 = vlaneseq
        %v1140 = vshrl.u32 %v1139, 7
        %v1141 = vsub.s32 0, %v1140
        %v1142 = vrot.slane %v1124, %v1141
        %v1144 = vmul.f32 %v1137, %v1142
        %v1146 = vlaneseq
        %v1147 = vshrl.u32 %v1146, 7
        %v1148 = vsub.s32 0, %v1147
        %v1149 = vrot.slane %v1125, %v1148
        %v1151 = vadd.f32 %v1144, %v1149
        %v1152 = vpack.c.bf16 %v1151, %v1151
        %v1153 = vld [vmem:[#allocation8] sm:$0xff]
        %v1154 = vld [vmem:[#allocation8 + $0x8] sm:$0xff]
        %v1155 = vld [vmem:[#allocation8 + $0x10] sm:$0xff]
        %v1156 = vld [vmem:[#allocation8 + $0x18] sm:$0xff]
        %v1157 = vld [vmem:[#allocation8 + $0x20] sm:$0xff]
        %v1158 = vld [vmem:[#allocation8 + $0x28] sm:$0xff]
        %v1159 = vld [vmem:[#allocation8 + $0x30] sm:$0xff]
        %v1160 = vld [vmem:[#allocation8 + $0x38] sm:$0xff]
        %v1161 = vld [vmem:[#allocation8 + $0x40] sm:$0xff]
        %v1162 = vld [vmem:[#allocation8 + $0x48] sm:$0xff]
        %v1163 = vld [vmem:[#allocation8 + $0x50] sm:$0xff]
        %v1164 = vld [vmem:[#allocation8 + $0x58] sm:$0xff]
        %v1165 = vld [vmem:[#allocation8 + $0x60] sm:$0xff]
        %v1166 = vld [vmem:[#allocation8 + $0x68] sm:$0xff]
        %v1167 = vld [vmem:[#allocation8 + $0x70] sm:$0xff]
        %v1168 = vld [vmem:[#allocation8 + $0x78] sm:$0xff]
        %v1169 = vld [vmem:[%s8] sm:$0x3]
        %v1171 = vlaneseq
        %v1172 = vshrl.u32 %v1171, 7
        %v1173 = vsub.s32 0, %v1172
        %v1174 = vrot.slane %v1169, %v1173
        %v1175 = vlaneseq
        %v1176 = vshrl.u32 %v1175, 7
        %v1177 = vsub.s32 1, %v1176
        %v1178 = vrot.slane %v1169, %v1177
        %v1197 = vunpack.c.l.b16 %v1153
        %v1198 = vunpack.c.h.b16 %v1153
        %v1199 = vunpack.c.l.b16 %v1154
        %v1200 = vunpack.c.h.b16 %v1154
        %v1201 = vunpack.c.l.b16 %v1155
        %v1202 = vunpack.c.h.b16 %v1155
        %v1203 = vunpack.c.l.b16 %v1156
        %v1204 = vunpack.c.h.b16 %v1156
        %v1205 = vunpack.c.l.b16 %v1157
        %v1206 = vunpack.c.h.b16 %v1157
        %v1207 = vunpack.c.l.b16 %v1158
        %v1208 = vunpack.c.h.b16 %v1158
        %v1209 = vunpack.c.l.b16 %v1159
        %v1210 = vunpack.c.h.b16 %v1159
        %v1211 = vunpack.c.l.b16 %v1160
        %v1212 = vunpack.c.h.b16 %v1160
        %v1213 = vunpack.c.l.b16 %v1161
        %v1214 = vunpack.c.h.b16 %v1161
        %v1215 = vunpack.c.l.b16 %v1162
        %v1216 = vunpack.c.h.b16 %v1162
        %v1217 = vunpack.c.l.b16 %v1163
        %v1218 = vunpack.c.h.b16 %v1163
        %v1219 = vunpack.c.l.b16 %v1164
        %v1220 = vunpack.c.h.b16 %v1164
        %v1221 = vunpack.c.l.b16 %v1165
        %v1222 = vunpack.c.h.b16 %v1165
        %v1223 = vunpack.c.l.b16 %v1166
        %v1224 = vunpack.c.h.b16 %v1166
        %v1225 = vunpack.c.l.b16 %v1167
        %v1226 = vunpack.c.h.b16 %v1167
        %v1227 = vunpack.c.l.b16 %v1168
        %v1228 = vunpack.c.h.b16 %v1168
        %v1229 = vpack.c.b16 %v1199, %v1197
        %v1230 = vpack.c.b16 %v1200, %v1198
        %v1231 = vpack.c.b16 %v1203, %v1201
        %v1232 = vpack.c.b16 %v1204, %v1202
        %v1233 = vpack.c.b16 %v1207, %v1205
        %v1234 = vpack.c.b16 %v1208, %v1206
        %v1235 = vpack.c.b16 %v1211, %v1209
        %v1236 = vpack.c.b16 %v1212, %v1210
        %v1237 = vpack.c.b16 %v1215, %v1213
        %v1238 = vpack.c.b16 %v1216, %v1214
        %v1239 = vpack.c.b16 %v1219, %v1217
        %v1240 = vpack.c.b16 %v1220, %v1218
        %v1241 = vpack.c.b16 %v1223, %v1221
        %v1242 = vpack.c.b16 %v1224, %v1222
        %v1243 = vpack.c.b16 %v1227, %v1225
        %v1244 = vpack.c.b16 %v1228, %v1226
        %1261 = vmatprep.subr.bf16.mxu0 %v1230
        %1262 = vmatpush1.bf16.msra.mxu0 %v1229
        %1263 = vmatprep.subr.bf16.mxu0 %v1232
        %1264 = vmatpush1.bf16.msra.mxu0 %v1231
        %1265 = vmatprep.subr.bf16.mxu0 %v1234
        %1266 = vmatpush1.bf16.msra.mxu0 %v1233
        %1267 = vmatprep.subr.bf16.mxu0 %v1236
        %1268 = vmatpush1.bf16.msra.mxu0 %v1235
        %1269 = vmatprep.subr.bf16.mxu0 %v1238
        %1270 = vmatpush1.bf16.msra.mxu0 %v1237
        %1271 = vmatprep.subr.bf16.mxu0 %v1240
        %1272 = vmatpush1.bf16.msra.mxu0 %v1239
        %1273 = vmatprep.subr.bf16.mxu0 %v1242
        %1274 = vmatpush1.bf16.msra.mxu0 %v1241
        %1275 = vmatprep.subr.bf16.mxu0 %v1244
        %1276 = vmatpush1.bf16.msra.mxu0 %v1243
        %1277 = vmatprep.subr.bf16.mxu0 0
        %1278 = vmatpush1.bf16.msra.mxu0 0
        %1279 = vmatprep.subr.bf16.mxu0 0
        %1280 = vmatpush1.bf16.msra.mxu0 0
        %1281 = vmatprep.subr.bf16.mxu0 0
        %1282 = vmatpush1.bf16.msra.mxu0 0
        %1283 = vmatprep.subr.bf16.mxu0 0
        %1284 = vmatpush1.bf16.msra.mxu0 0
        %1285 = vmatprep.subr.bf16.mxu0 0
        %1286 = vmatpush1.bf16.msra.mxu0 0
        %1287 = vmatprep.subr.bf16.mxu0 0
        %1288 = vmatpush1.bf16.msra.mxu0 0
        %1289 = vmatprep.subr.bf16.mxu0 0
        %1290 = vmatpush1.bf16.msra.mxu0 0
        %1291 = vmatprep.subr.bf16.mxu0 0
        %1292 = vmatpush1.bf16.msra.mxu0 0
        %1293 = vmatprep.mubr.bf16.mxu0 0
        %1294 = vmatmul.mubr.bf16.gmra.mrb[0].mxu0 %v1152
        %v1295 = vpop.f32.mrb[0].mxu0
        %v1296 = vadd.f32 %v1174, %v1295
        %v1297 = vpop.f32.mrb[0].mxu0
        %v1298 = vadd.f32 %v1178, %v1297
        %v1299 = vpop.f32.mrb[0].mxu0
        %v1300 = vpop.f32.mrb[0].mxu0
        %1301 = vdwg.mxu0
        %v1302 = vmax.f32 %v1296, 0.0
        %v1303 = vmax.f32 %v1298, 0.0
        %v1304 = vpack.c.bf16 %v1302, %v1302
        %v1305 = vpack.c.bf16 %v1303, %v1303
        %v1306 = vld [vmem:[#allocation10] sm:$0xf]
        %v1307 = vld [vmem:[#allocation10 + $0x4] sm:$0xf]
        %v1308 = vld [vmem:[#allocation10 + $0x8] sm:$0xf]
        %v1309 = vld [vmem:[#allocation10 + $0xc] sm:$0xf]
        %v1310 = vld [vmem:[#allocation10 + $0x10] sm:$0xf]
        %v1311 = vld [vmem:[#allocation10 + $0x14] sm:$0xf]
        %v1312 = vld [vmem:[#allocation10 + $0x18] sm:$0xf]
        %v1313 = vld [vmem:[#allocation10 + $0x1c] sm:$0xf]
        %v1314 = vld [vmem:[#allocation10 + $0x20] sm:$0xf]
        %v1315 = vld [vmem:[#allocation10 + $0x24] sm:$0xf]
        %v1316 = vld [vmem:[#allocation10 + $0x28] sm:$0xf]
        %v1317 = vld [vmem:[#allocation10 + $0x2c] sm:$0xf]
        %v1318 = vld [vmem:[#allocation10 + $0x30] sm:$0xf]
        %v1319 = vld [vmem:[#allocation10 + $0x34] sm:$0xf]
        %v1320 = vld [vmem:[#allocation10 + $0x38] sm:$0xf]
        %v1321 = vld [vmem:[#allocation10 + $0x3c] sm:$0xf]
        %v1322 = vld [vmem:[#allocation10 + $0x40] sm:$0xf]
        %v1323 = vld [vmem:[#allocation10 + $0x44] sm:$0xf]
        %v1324 = vld [vmem:[#allocation10 + $0x48] sm:$0xf]
        %v1325 = vld [vmem:[#allocation10 + $0x4c] sm:$0xf]
        %v1326 = vld [vmem:[#allocation10 + $0x50] sm:$0xf]
        %v1327 = vld [vmem:[#allocation10 + $0x54] sm:$0xf]
        %v1328 = vld [vmem:[#allocation10 + $0x58] sm:$0xf]
        %v1329 = vld [vmem:[#allocation10 + $0x5c] sm:$0xf]
        %v1330 = vld [vmem:[#allocation10 + $0x60] sm:$0xf]
        %v1331 = vld [vmem:[#allocation10 + $0x64] sm:$0xf]
        %v1332 = vld [vmem:[#allocation10 + $0x68] sm:$0xf]
        %v1333 = vld [vmem:[#allocation10 + $0x6c] sm:$0xf]
        %v1334 = vld [vmem:[#allocation10 + $0x70] sm:$0xf]
        %v1335 = vld [vmem:[#allocation10 + $0x74] sm:$0xf]
        %v1336 = vld [vmem:[#allocation10 + $0x78] sm:$0xf]
        %v1337 = vld [vmem:[#allocation10 + $0x7c] sm:$0xf]
        %v1338 = vld [vmem:[%s10] sm:$0x1]
        %v1340 = vlaneseq
        %v1341 = vshrl.u32 %v1340, 7
        %v1342 = vsub.s32 0, %v1341
        %v1343 = vrot.slane %v1338, %v1342
        %v1377 = vunpack.c.l.b16 %v1306
        %v1378 = vunpack.c.l.b16 %v1307
        %v1379 = vunpack.c.l.b16 %v1308
        %v1380 = vunpack.c.l.b16 %v1309
        %v1381 = vunpack.c.l.b16 %v1310
        %v1382 = vunpack.c.l.b16 %v1311
        %v1383 = vunpack.c.l.b16 %v1312
        %v1384 = vunpack.c.l.b16 %v1313
        %v1385 = vunpack.c.l.b16 %v1314
        %v1386 = vunpack.c.l.b16 %v1315
        %v1387 = vunpack.c.l.b16 %v1316
        %v1388 = vunpack.c.l.b16 %v1317
        %v1389 = vunpack.c.l.b16 %v1318
        %v1390 = vunpack.c.l.b16 %v1319
        %v1391 = vunpack.c.l.b16 %v1320
        %v1392 = vunpack.c.l.b16 %v1321
        %v1393 = vunpack.c.l.b16 %v1322
        %v1394 = vunpack.c.l.b16 %v1323
        %v1395 = vunpack.c.l.b16 %v1324
        %v1396 = vunpack.c.l.b16 %v1325
        %v1397 = vunpack.c.l.b16 %v1326
        %v1398 = vunpack.c.l.b16 %v1327
        %v1399 = vunpack.c.l.b16 %v1328
        %v1400 = vunpack.c.l.b16 %v1329
        %v1401 = vunpack.c.l.b16 %v1330
        %v1402 = vunpack.c.l.b16 %v1331
        %v1403 = vunpack.c.l.b16 %v1332
        %v1404 = vunpack.c.l.b16 %v1333
        %v1405 = vunpack.c.l.b16 %v1334
        %v1406 = vunpack.c.l.b16 %v1335
        %v1407 = vunpack.c.l.b16 %v1336
        %v1408 = vunpack.c.l.b16 %v1337
        %v1409 = vpack.c.b16 %v1378, %v1377
        %v1410 = vpack.c.b16 %v1380, %v1379
        %v1411 = vpack.c.b16 %v1382, %v1381
        %v1412 = vpack.c.b16 %v1384, %v1383
        %v1413 = vpack.c.b16 %v1386, %v1385
        %v1414 = vpack.c.b16 %v1388, %v1387
        %v1415 = vpack.c.b16 %v1390, %v1389
        %v1416 = vpack.c.b16 %v1392, %v1391
        %v1417 = vpack.c.b16 %v1394, %v1393
        %v1418 = vpack.c.b16 %v1396, %v1395
        %v1419 = vpack.c.b16 %v1398, %v1397
        %v1420 = vpack.c.b16 %v1400, %v1399
        %v1421 = vpack.c.b16 %v1402, %v1401
        %v1422 = vpack.c.b16 %v1404, %v1403
        %v1423 = vpack.c.b16 %v1406, %v1405
        %v1424 = vpack.c.b16 %v1408, %v1407
        %1441 = vmatprep.subr.bf16.mxu0 0
        %1442 = vmatpush1.bf16.msra.mxu0 %v1409
        %1443 = vmatprep.subr.bf16.mxu0 0
        %1444 = vmatpush1.bf16.msra.mxu0 %v1410
        %1445 = vmatprep.subr.bf16.mxu0 0
        %1446 = vmatpush1.bf16.msra.mxu0 %v1411
        %1447 = vmatprep.subr.bf16.mxu0 0
        %1448 = vmatpush1.bf16.msra.mxu0 %v1412
        %1449 = vmatprep.subr.bf16.mxu0 0
        %1450 = vmatpush1.bf16.msra.mxu0 %v1413
        %1451 = vmatprep.subr.bf16.mxu0 0
        %1452 = vmatpush1.bf16.msra.mxu0 %v1414
        %1453 = vmatprep.subr.bf16.mxu0 0
        %1454 = vmatpush1.bf16.msra.mxu0 %v1415
        %1455 = vmatprep.subr.bf16.mxu0 0
        %1456 = vmatpush1.bf16.msra.mxu0 %v1416
        %1457 = vmatprep.subr.bf16.mxu0 0
        %1458 = vmatpush1.bf16.msra.mxu0 %v1417
        %1459 = vmatprep.subr.bf16.mxu0 0
        %1460 = vmatpush1.bf16.msra.mxu0 %v1418
        %1461 = vmatprep.subr.bf16.mxu0 0
        %1462 = vmatpush1.bf16.msra.mxu0 %v1419
        %1463 = vmatprep.subr.bf16.mxu0 0
        %1464 = vmatpush1.bf16.msra.mxu0 %v1420
        %1465 = vmatprep.subr.bf16.mxu0 0
        %1466 = vmatpush1.bf16.msra.mxu0 %v1421
        %1467 = vmatprep.subr.bf16.mxu0 0
        %1468 = vmatpush1.bf16.msra.mxu0 %v1422
        %1469 = vmatprep.subr.bf16.mxu0 0
        %1470 = vmatpush1.bf16.msra.mxu0 %v1423
        %1471 = vmatprep.subr.bf16.mxu0 0
        %1472 = vmatpush1.bf16.msra.mxu0 %v1424
        %1473 = vmatprep.mubr.bf16.mxu0 %v1305
        %1474 = vmatmul.mubr.bf16.gmra.mrb[0].mxu0 %v1304
        %v1475 = vpop.f32.mrb[0].mxu0
        %v1476 = vadd.f32 %v1343, %v1475
        %v1477 = vpop.f32.mrb[0].mxu0
        %v1478 = vpop.f32.mrb[0].mxu0
        %v1479 = vpop.f32.mrb[0].mxu0
        %1480 = vdwg.mxu0
        %v1481 = vadd.f32 %v1151, %v1476
        %v1482 = vld [vmem:[%s11] sm:$0x1]
        %v1483 = vld [vmem:[%s12] sm:$0x1]
        %1484 = vadd.xlane.f32.xlu0 %v1481
        %v1485 = vpop.xlane.xlu0 %1484
        %v1486 = vmul.f32 %v1485, %v1128
        %v1487 = vsub.f32 %v1481, %v1486
        %v1488 = vmul.f32 %v1487, %v1487
        %1489 = vadd.xlane.f32.xlu0 %v1488
        %v1490 = vpop.xlane.xlu0 %1489
        %v1491 = vmul.f32 %v1490, %v1128
        %v1492 = vadd.f32 %v1491, 1e-05
        %v1493 = vrsqrt.pop %v1492
        %v1494 = vmul.f32 %v1487, %v1493
        %v1496 = vlaneseq
        %v1497 = vshrl.u32 %v1496, 7
        %v1498 = vsub.s32 0, %v1497
        %v1499 = vrot.slane %v1482, %v1498
        %v1501 = vmul.f32 %v1494, %v1499
        %v1503 = vlaneseq
        %v1504 = vshrl.u32 %v1503, 7
        %v1505 = vsub.s32 0, %v1504
        %v1506 = vrot.slane %v1483, %v1505
        %v1508 = vadd.f32 %v1501, %v1506
        %v1509 = vpack.c.bf16 %v1508, %v1508
        %1510 = vst [vmem:[%s513] sm:$0xf] %v1509
        %s1511 = sand.u32 %s318, 1
        %s1512 = scalar_lea.sflag [#allocation4], %s1511
        %s1513 = sand.u32 %s318, 1
        %s1514 = smul.addr %s1513, 4
        %s1515 = scalar_lea.vmem [#allocation11], %s1514
        // Predicated region
        $region93: #{tpu_custom_call.1} parent=71 // pred_check
          %p1516 = pneg %p328
        $region94: #{tpu_custom_call.1} parent=71 // pred_check_branch
          %1518 = sbr.rel (%p1516) target = $region96
        $region95: #{tpu_custom_call.1} parent=71 // pred_region
          %s1520 = ssub.s32 64, 64
          %1521 = vsyncadd %s1512, %s1520
          %s1522 = smul.addr %s32, 64
          %s1523 = scalar_lea.hbm %s13, %s1522
          %s1525 = sshll.u32 %s1515, 4
          %s1526 = int_to_ptr.vmem [resolvable:$true] %s1525
          %1528 = dma.vmem_to_hbm [thread:$0]  %s1526, 64, %s1523, %s1512
        $region96: #{tpu_custom_call.1} parent=71 // pred_fallthru
          _
      $region72: #{tpu_custom_call.1} parent=5 // pred_fallthru
        _
      %p1529 = scmp.le.s32.totalorder 2, %s27
      // Predicated region
      $region97: #{tpu_custom_call.1} parent=5 // pred_check
        %p1530 = pneg %p1529
      $region98: #{tpu_custom_call.1} parent=5 // pred_check_branch
        %1532 = sbr.rel (%p1530) target = $region100
      $region99: #{tpu_custom_call.1} parent=5 // pred_region
        %s1533 = ssub.s32 %s27, 2
        // Predicated region
        $region101: #{tpu_custom_call.1} parent=99 // pred_check
          %p1534 = pneg %p334
        $region102: #{tpu_custom_call.1} parent=99 // pred_check_branch
          %1536 = sbr.rel (%p1534) target = $region104
        $region103: #{tpu_custom_call.1} parent=99 // pred_region
          %s1537 = sand.u32 %s319, 1
          %s1538 = scalar_lea.sflag [#allocation4], %s1537
          %s1539 = sand.u32 %s319, 1
          %s1540 = smul.addr %s1539, 4
          %s1541 = scalar_lea.vmem [#allocation11], %s1540
          %1542 = dma.done %s1538, 64
        $region104: #{tpu_custom_call.1} parent=99 // pred_fallthru
          _
      $region100: #{tpu_custom_call.1} parent=5 // pred_fallthru
        _
    $region6: #{tpu_custom_call.1} parent=1 // loop_footer
      %s31 = sadd.s32 1, %s27
    $region7: #{tpu_custom_call.1} parent=1 // loop_footer_branch
      %26 = sbr.rel target = $region3
    $region8: #{tpu_custom_call.1} parent=1 // loop_exit
      _
    %1543 = vsyncpa [#allocation3], 1
    %s1544 = scalar_lea.sflag [#allocation3], 1
    %1545 = vsyncpa %s1544, 1
    %1546 = vsyncpa [#allocation6], 1
    %1547 = vsyncpa [#allocation9], 1
    %1548 = vsyncpa [#allocation4], 1
    %s1549 = scalar_lea.sflag [#allocation4], 1
    %1550 = vsyncpa %s1549, 1

</llo_original>
